<compile_context>
chip_gen: v6e
topology: v6e:2x2x1
jax: 0.10.0
libtpu: 0.0.40
codegen_flags: <defaults>
</compile_context>

<pallas_src>
import functools

import jax
import jax.numpy as jnp
from jax.experimental import pallas as pl
from jax.experimental.pallas import tpu as pltpu

EPS = 1e-5


def _round_up(n, m):
    return ((n + m - 1) // m) * m


def _select_batch_tile(B):
    """Static (trace-time) batch-tile selection.

    - B < 128: single tile rounded to 16 rows (bf16 lhs packing).
    - v5e / unknown: TB=128 (4x 128x128 MXU; M=128 already fills a pass and
      larger tiles only grow spills / pressure the single vst slot).
    - v6e: TB=256 once B >= 256 (2x 256x256 MXU, halves per-step overhead).
    - v7x: TB=256 only once B >= 512 so grid >= 2 and both TensorCores are
      used via the "parallel" batch axis.
    """
    if B < 128:
        return _round_up(max(B, 1), 16)
    kind = ""
    try:
        kind = jax.devices()[0].device_kind.lower()
    except Exception:
        pass
    if "v6" in kind and B >= 256:
        return 256
    if ("v7" in kind or "7x" in kind) and B >= 512:
        return 256
    return 128


# --------------------------------------------------------------------------
# Kernel: BN-affine + 4x Linear. bf16 MXU operands, f32 accumulation,
# bf16-carried activations. One grid axis over batch tiles.
# --------------------------------------------------------------------------
def _mlp_kernel(x_ref, scale_ref, shift_ref,
                w1_ref, b1_ref, w2_ref, b2_ref,
                w3_ref, b3_ref, w4_ref, b4_ref, out_ref):
    # Train-mode BN as a fused affine (scale/shift from batch stats), f32 VPU.
    h = (x_ref[...] * scale_ref[...] + shift_ref[...]).astype(jnp.bfloat16)

    # Hidden layers: bf16 MXU operands, f32 accumulation; carry the post-ReLU
    # activations in bf16 to halve spill traffic of the wide intermediates.
    h = jnp.maximum(
        jnp.dot(h, w1_ref[...], preferred_element_type=jnp.float32)
        + b1_ref[...], 0.0).astype(jnp.bfloat16)
    h = jnp.maximum(
        jnp.dot(h, w2_ref[...], preferred_element_type=jnp.float32)
        + b2_ref[...], 0.0).astype(jnp.bfloat16)
    h = jnp.maximum(
        jnp.dot(h, w3_ref[...], preferred_element_type=jnp.float32)
        + b3_ref[...], 0.0).astype(jnp.bfloat16)

    out_ref[...] = (jnp.dot(h, w4_ref[...],
                            preferred_element_type=jnp.float32) + b4_ref[...])


# --------------------------------------------------------------------------
# Wrapper
# --------------------------------------------------------------------------
@functools.partial(jax.jit, static_argnames=("n_output",))
def net_forward(x, p, *, n_output):
    """x: (B, n_feature) f32. p: prepared (padded, bf16-weight) params."""
    B, F = x.shape
    x = x.astype(jnp.float32)

    # Train-mode BatchNorm1d statistics (two-pass, biased variance) -> fused
    # per-feature scale/shift, computed with plain XLA ops (no extra kernel).
    mean = jnp.mean(x, axis=0, keepdims=True)
    var = jnp.mean(jnp.square(x - mean), axis=0, keepdims=True)
    scale = p["gamma"] * jax.lax.rsqrt(var + EPS)
    shift = p["beta"] - mean * scale

    TB = _select_batch_tile(B)
    Bp = _round_up(B, TB)
    xp = jnp.pad(x, ((0, Bp - B), (0, 0)))
    grid = (Bp // TB,)

    H1p = p["w1"].shape[1]
    H2p = p["w2"].shape[1]
    H3p = p["w3"].shape[1]
    OUTp = p["w4"].shape[1]

    def const(shape):
        # Constant index_map: stays VMEM-resident across batch tiles.
        return pl.BlockSpec(shape, lambda i: (0, 0))

    out = pl.pallas_call(
        _mlp_kernel,
        grid=grid,
        in_specs=[
            pl.BlockSpec((TB, F), lambda i: (i, 0)),
            const((1, F)), const((1, F)),
            const((F, H1p)), const((1, H1p)),
            const((H1p, H2p)), const((1, H2p)),
            const((H2p, H3p)), const((1, H3p)),
            const((H3p, OUTp)), const((1, OUTp)),
        ],
        out_specs=pl.BlockSpec((TB, OUTp), lambda i: (i, 0)),
        out_shape=jax.ShapeDtypeStruct((Bp, OUTp), jnp.float32),
        compiler_params=pltpu.CompilerParams(
            dimension_semantics=("parallel",)),
    )(xp, scale, shift,
      p["w1"], p["b1"], p["w2"], p["b2"],
      p["w3"], p["b3"], p["w4"], p["b4"])

    return out[:B, :n_output]


# --------------------------------------------------------------------------
# Parameter construction / preparation
# --------------------------------------------------------------------------
def init_params(key, n_feature, n_hidden1, n_hidden2, n_hidden3, n_output):
    """Deterministic synthetic init mirroring PyTorch defaults. Linear weights
    are stored (in, out) (transpose of PyTorch's (out, in)) so forward is
    h @ W + b == PyTorch's x @ W_pt.T + b."""
    dims = [(n_feature, n_hidden1), (n_hidden1, n_hidden2),
            (n_hidden2, n_hidden3), (n_hidden3, n_output)]
    params = {
        "gamma": jnp.ones((n_feature,), jnp.float32),   # BatchNorm1d weight=1
        "beta": jnp.zeros((n_feature,), jnp.float32),   # BatchNorm1d bias=0
    }
    for idx, (fan_in, fan_out) in enumerate(dims, start=1):
        key, kw, kb = jax.random.split(key, 3)
        bound = 1.0 / (fan_in ** 0.5)
        params[f"w{idx}"] = jax.random.uniform(
            kw, (fan_in, fan_out), jnp.float32, minval=-bound, maxval=bound)
        params[f"b{idx}"] = jax.random.uniform(
            kb, (fan_out,), jnp.float32, minval=-bound, maxval=bound)
    return params


def prepare_params(params):
    """One-time prep: pad hidden/output dims to multiples of 128 (lane-dense
    MXU/store tiles), cast weights to bf16, keep biases/BN affine in f32 and
    pre-reshape them to (1, C). All padding entries are exactly zero so padded
    units are ReLU(0)=0 and cannot leak downstream."""
    F = params["w1"].shape[0]
    dims = [params[f"w{i}"].shape[1] for i in (1, 2, 3, 4)]
    pdims = [_round_up(d, 128) for d in dims]
    in_dims = [F, pdims[0], pdims[1], pdims[2]]
    true_in = [F, dims[0], dims[1], dims[2]]

    prepared = {
        "gamma": params["gamma"].reshape(1, -1).astype(jnp.float32),
        "beta": params["beta"].reshape(1, -1).astype(jnp.float32),
    }
    for idx in range(1, 5):
        ip, op = in_dims[idx - 1], pdims[idx - 1]
        di, do = true_in[idx - 1], dims[idx - 1]
        w = params[f"w{idx}"]
        b = params[f"b{idx}"]
        wp = jnp.zeros((ip, op), jnp.float32).at[:di, :do].set(w)
        prepared[f"w{idx}"] = wp.astype(jnp.bfloat16)
        prepared[f"b{idx}"] = (
            jnp.zeros((1, op), jnp.float32).at[0, :do].set(b))
    return prepared


# --------------------------------------------------------------------------
# References
# --------------------------------------------------------------------------
def reference_forward_f32(x, params):
    """Plain-JAX f32 reference (PyTorch train-mode forward)."""
    mean = jnp.mean(x, axis=0, keepdims=True)
    var = jnp.mean((x - mean) ** 2, axis=0, keepdims=True)
    h = (x - mean) / jnp.sqrt(var + EPS) * params["gamma"] + params["beta"]
    h = jax.nn.relu(h @ params["w1"] + params["b1"])
    h = jax.nn.relu(h @ params["w2"] + params["b2"])
    h = jax.nn.relu(h @ params["w3"] + params["b3"])
    return h @ params["w4"] + params["b4"]


def reference_forward_bf16(x, params):
    """Replicates the kernel's numerics (two-pass stats, bf16 matmul operands
    and bf16-carried activations, f32 accumulation) for a tight check."""
    mean = jnp.mean(x, axis=0, keepdims=True)
    var = jnp.mean(jnp.square(x - mean), axis=0, keepdims=True)
    scale = params["gamma"] * jax.lax.rsqrt(var + EPS)
    shift = params["beta"] - mean * scale
    h = (x * scale + shift).astype(jnp.bfloat16)

    def layer(h, w, b, relu=True):
        out = jnp.dot(h, w.astype(jnp.bfloat16),
                      preferred_element_type=jnp.float32) + b
        if relu:
            out = jnp.maximum(out, 0.0).astype(jnp.bfloat16)
        return out

    h = layer(h, params["w1"], params["b1"])
    h = layer(h, params["w2"], params["b2"])
    h = layer(h, params["w3"], params["b3"])
    return layer(h, params["w4"], params["b4"], relu=False)


# --------------------------------------------------------------------------
if __name__ == "__main__":
    # Shapes consistent with Net(n_feature=32) defaults:
    # hidden1=1000, hidden2=500, hidden3=100, output=2.
    B, N_FEATURE = 8, 32
    N_H1, N_H2, N_H3, N_OUT = 1000, 500, 100, 2

    key = jax.random.PRNGKey(0)
    key, kx = jax.random.split(key)
    x = jax.random.normal(kx, (B, N_FEATURE), jnp.float32)

    params = init_params(key, N_FEATURE, N_H1, N_H2, N_H3, N_OUT)
    prepared = prepare_params(params)

    out = net_forward(x, prepared, n_output=N_OUT)
    out = jax.block_until_ready(out)

    ref_bf16 = reference_forward_bf16(x, params)
    ref_f32 = reference_forward_f32(x, params)

    assert out.shape == (B, N_OUT)
    assert jnp.allclose(out, ref_bf16, atol=2e-3, rtol=2e-3), \
        "mismatch vs bf16-emulating reference"
    assert jnp.allclose(out, ref_f32, atol=5e-2, rtol=5e-2), \
        "mismatch vs f32 reference"

    print("KERNEL_OK")
</pallas_src>

<mosaic_0001>
module attributes {stable_mosaic.version = 11 : i64} {
  func.func @_mlp_kernel(%arg0: i32, %arg1: memref<16x32xf32, #tpu.memory_space<vmem>>, %arg2: memref<1x32xf32, #tpu.memory_space<vmem>>, %arg3: memref<1x32xf32, #tpu.memory_space<vmem>>, %arg4: memref<32x1024xbf16, #tpu.memory_space<vmem>>, %arg5: memref<1x1024xf32, #tpu.memory_space<vmem>>, %arg6: memref<1024x512xbf16, #tpu.memory_space<vmem>>, %arg7: memref<1x512xf32, #tpu.memory_space<vmem>>, %arg8: memref<512x128xbf16, #tpu.memory_space<vmem>>, %arg9: memref<1x128xf32, #tpu.memory_space<vmem>>, %arg10: memref<128x128xbf16, #tpu.memory_space<vmem>>, %arg11: memref<1x128xf32, #tpu.memory_space<vmem>>, %arg12: memref<16x128xf32, #tpu.memory_space<vmem>>) attributes {dimension_semantics = [#tpu.dimension_semantics<parallel>], iteration_bounds = array<i64: 1>, scalar_prefetch = 0 : i64, scratch_operands = 0 : i64, tpu.core_type = #tpu.core_type<tc>, window_params = [{transform_indices = @transform_0, window_bounds = array<i64: 16, 32>}, {pipeline_mode = #tpu.pipeline_mode<synchronous>, transform_indices = @transform_1, window_bounds = array<i64: 1, 32>}, {pipeline_mode = #tpu.pipeline_mode<synchronous>, transform_indices = @transform_2, window_bounds = array<i64: 1, 32>}, {pipeline_mode = #tpu.pipeline_mode<synchronous>, transform_indices = @transform_3, window_bounds = array<i64: 32, 1024>}, {pipeline_mode = #tpu.pipeline_mode<synchronous>, transform_indices = @transform_4, window_bounds = array<i64: 1, 1024>}, {pipeline_mode = #tpu.pipeline_mode<synchronous>, transform_indices = @transform_5, window_bounds = array<i64: 1024, 512>}, {pipeline_mode = #tpu.pipeline_mode<synchronous>, transform_indices = @transform_6, window_bounds = array<i64: 1, 512>}, {pipeline_mode = #tpu.pipeline_mode<synchronous>, transform_indices = @transform_7, window_bounds = array<i64: 512, 128>}, {pipeline_mode = #tpu.pipeline_mode<synchronous>, transform_indices = @transform_8, window_bounds = array<i64: 1, 128>}, {pipeline_mode = #tpu.pipeline_mode<synchronous>, transform_indices = @transform_9, window_bounds = array<i64: 128, 128>}, {pipeline_mode = #tpu.pipeline_mode<synchronous>, transform_indices = @transform_10, window_bounds = array<i64: 1, 128>}, {transform_indices = @transform_11, window_bounds = array<i64: 16, 128>}]} {
    %c0 = arith.constant 0 : index
    %c0_0 = arith.constant 0 : index
    %0 = vector.load %arg1[%c0, %c0_0] : memref<16x32xf32, #tpu.memory_space<vmem>>, vector<16x32xf32>
    %c0_1 = arith.constant 0 : index
    %c0_2 = arith.constant 0 : index
    %1 = vector.load %arg2[%c0_1, %c0_2] : memref<1x32xf32, #tpu.memory_space<vmem>>, vector<1x32xf32>
    %2 = vector.broadcast %1 : vector<1x32xf32> to vector<16x32xf32>
    %3 = arith.mulf %0, %2 : vector<16x32xf32>
    %c0_3 = arith.constant 0 : index
    %c0_4 = arith.constant 0 : index
    %4 = vector.load %arg3[%c0_3, %c0_4] : memref<1x32xf32, #tpu.memory_space<vmem>>, vector<1x32xf32>
    %5 = vector.broadcast %4 : vector<1x32xf32> to vector<16x32xf32>
    %6 = arith.addf %3, %5 : vector<16x32xf32>
    %7 = arith.truncf %6 : vector<16x32xf32> to vector<16x32xbf16>
    %c0_5 = arith.constant 0 : index
    %c0_6 = arith.constant 0 : index
    %8 = vector.load %arg4[%c0_5, %c0_6] : memref<32x1024xbf16, #tpu.memory_space<vmem>>, vector<32x1024xbf16>
    %cst = arith.constant dense<0.000000e+00> : vector<16x1024xf32>
    %9 = tpu.matmul %7, %8, %cst {dimension_numbers = #tpu.dot_dimension_numbers<[1], [0], [0], [1], [0, 0, 1, 1], [], []>} : vector<16x32xbf16>, vector<32x1024xbf16>, vector<16x1024xf32> -> vector<16x1024xf32>
    %c0_7 = arith.constant 0 : index
    %c0_8 = arith.constant 0 : index
    %10 = vector.load %arg5[%c0_7, %c0_8] : memref<1x1024xf32, #tpu.memory_space<vmem>>, vector<1x1024xf32>
    %11 = vector.broadcast %10 : vector<1x1024xf32> to vector<16x1024xf32>
    %12 = arith.addf %9, %11 : vector<16x1024xf32>
    %cst_9 = arith.constant 0.000000e+00 : f32
    %13 = vector.broadcast %cst_9 : f32 to vector<16x1024xf32>
    %14 = arith.maximumf %12, %13 : vector<16x1024xf32>
    %15 = arith.truncf %14 : vector<16x1024xf32> to vector<16x1024xbf16>
    %c0_10 = arith.constant 0 : index
    %c0_11 = arith.constant 0 : index
    %16 = vector.load %arg6[%c0_10, %c0_11] : memref<1024x512xbf16, #tpu.memory_space<vmem>>, vector<1024x512xbf16>
    %cst_12 = arith.constant dense<0.000000e+00> : vector<16x512xf32>
    %17 = tpu.matmul %15, %16, %cst_12 {dimension_numbers = #tpu.dot_dimension_numbers<[1], [0], [0], [1], [0, 0, 1, 1], [], []>} : vector<16x1024xbf16>, vector<1024x512xbf16>, vector<16x512xf32> -> vector<16x512xf32>
    %c0_13 = arith.constant 0 : index
    %c0_14 = arith.constant 0 : index
    %18 = vector.load %arg7[%c0_13, %c0_14] : memref<1x512xf32, #tpu.memory_space<vmem>>, vector<1x512xf32>
    %19 = vector.broadcast %18 : vector<1x512xf32> to vector<16x512xf32>
    %20 = arith.addf %17, %19 : vector<16x512xf32>
    %cst_15 = arith.constant 0.000000e+00 : f32
    %21 = vector.broadcast %cst_15 : f32 to vector<16x512xf32>
    %22 = arith.maximumf %20, %21 : vector<16x512xf32>
    %23 = arith.truncf %22 : vector<16x512xf32> to vector<16x512xbf16>
    %c0_16 = arith.constant 0 : index
    %c0_17 = arith.constant 0 : index
    %24 = vector.load %arg8[%c0_16, %c0_17] : memref<512x128xbf16, #tpu.memory_space<vmem>>, vector<512x128xbf16>
    %cst_18 = arith.constant dense<0.000000e+00> : vector<16x128xf32>
    %25 = tpu.matmul %23, %24, %cst_18 {dimension_numbers = #tpu.dot_dimension_numbers<[1], [0], [0], [1], [0, 0, 1, 1], [], []>} : vector<16x512xbf16>, vector<512x128xbf16>, vector<16x128xf32> -> vector<16x128xf32>
    %c0_19 = arith.constant 0 : index
    %c0_20 = arith.constant 0 : index
    %26 = vector.load %arg9[%c0_19, %c0_20] : memref<1x128xf32, #tpu.memory_space<vmem>>, vector<1x128xf32>
    %27 = vector.broadcast %26 : vector<1x128xf32> to vector<16x128xf32>
    %28 = arith.addf %25, %27 : vector<16x128xf32>
    %cst_21 = arith.constant 0.000000e+00 : f32
    %29 = vector.broadcast %cst_21 : f32 to vector<16x128xf32>
    %30 = arith.maximumf %28, %29 : vector<16x128xf32>
    %31 = arith.truncf %30 : vector<16x128xf32> to vector<16x128xbf16>
    %c0_22 = arith.constant 0 : index
    %c0_23 = arith.constant 0 : index
    %32 = vector.load %arg10[%c0_22, %c0_23] : memref<128x128xbf16, #tpu.memory_space<vmem>>, vector<128x128xbf16>
    %cst_24 = arith.constant dense<0.000000e+00> : vector<16x128xf32>
    %33 = tpu.matmul %31, %32, %cst_24 {dimension_numbers = #tpu.dot_dimension_numbers<[1], [0], [0], [1], [0, 0, 1, 1], [], []>} : vector<16x128xbf16>, vector<128x128xbf16>, vector<16x128xf32> -> vector<16x128xf32>
    %c0_25 = arith.constant 0 : index
    %c0_26 = arith.constant 0 : index
    %34 = vector.load %arg11[%c0_25, %c0_26] : memref<1x128xf32, #tpu.memory_space<vmem>>, vector<1x128xf32>
    %35 = vector.broadcast %34 : vector<1x128xf32> to vector<16x128xf32>
    %36 = arith.addf %33, %35 : vector<16x128xf32>
    %c0_27 = arith.constant 0 : index
    %c0_28 = arith.constant 0 : index
    %37 = vector.load %arg12[%c0_27, %c0_28] : memref<16x128xf32, #tpu.memory_space<vmem>>, vector<16x128xf32>
    tpu.vector_store %arg12[%c0_27, %c0_28], %36 {strides = array<i32>} : memref<16x128xf32, #tpu.memory_space<vmem>>, vector<16x128xf32>,
    return
  }
  func.func @transform_0(%arg0: i32) -> (i32, i32) {
    %c0_i32 = arith.constant 0 : i32
    %c0_i32_0 = arith.constant 0 : i32
    return %arg0, %c0_i32 : i32, i32
  }
  func.func @transform_1(%arg0: i32) -> (i32, i32) {
    %c0_i32 = arith.constant 0 : i32
    %c0_i32_0 = arith.constant 0 : i32
    %c0_i32_1 = arith.constant 0 : i32
    return %c0_i32, %c0_i32_0 : i32, i32
  }
  func.func @transform_2(%arg0: i32) -> (i32, i32) {
    %c0_i32 = arith.constant 0 : i32
    %c0_i32_0 = arith.constant 0 : i32
    %c0_i32_1 = arith.constant 0 : i32
    return %c0_i32, %c0_i32_0 : i32, i32
  }
  func.func @transform_3(%arg0: i32) -> (i32, i32) {
    %c0_i32 = arith.constant 0 : i32
    %c0_i32_0 = arith.constant 0 : i32
    %c0_i32_1 = arith.constant 0 : i32
    return %c0_i32, %c0_i32_0 : i32, i32
  }
  func.func @transform_4(%arg0: i32) -> (i32, i32) {
    %c0_i32 = arith.constant 0 : i32
    %c0_i32_0 = arith.constant 0 : i32
    %c0_i32_1 = arith.constant 0 : i32
    return %c0_i32, %c0_i32_0 : i32, i32
  }
  func.func @transform_5(%arg0: i32) -> (i32, i32) {
    %c0_i32 = arith.constant 0 : i32
    %c0_i32_0 = arith.constant 0 : i32
    %c0_i32_1 = arith.constant 0 : i32
    return %c0_i32, %c0_i32_0 : i32, i32
  }
  func.func @transform_6(%arg0: i32) -> (i32, i32) {
    %c0_i32 = arith.constant 0 : i32
    %c0_i32_0 = arith.constant 0 : i32
    %c0_i32_1 = arith.constant 0 : i32
    return %c0_i32, %c0_i32_0 : i32, i32
  }
  func.func @transform_7(%arg0: i32) -> (i32, i32) {
    %c0_i32 = arith.constant 0 : i32
    %c0_i32_0 = arith.constant 0 : i32
    %c0_i32_1 = arith.constant 0 : i32
    return %c0_i32, %c0_i32_0 : i32, i32
  }
  func.func @transform_8(%arg0: i32) -> (i32, i32) {
    %c0_i32 = arith.constant 0 : i32
    %c0_i32_0 = arith.constant 0 : i32
    %c0_i32_1 = arith.constant 0 : i32
    return %c0_i32, %c0_i32_0 : i32, i32
  }
  func.func @transform_9(%arg0: i32) -> (i32, i32) {
    %c0_i32 = arith.constant 0 : i32
    %c0_i32_0 = arith.constant 0 : i32
    %c0_i32_1 = arith.constant 0 : i32
    return %c0_i32, %c0_i32_0 : i32, i32
  }
  func.func @transform_10(%arg0: i32) -> (i32, i32) {
    %c0_i32 = arith.constant 0 : i32
    %c0_i32_0 = arith.constant 0 : i32
    %c0_i32_1 = arith.constant 0 : i32
    return %c0_i32, %c0_i32_0 : i32, i32
  }
  func.func @transform_11(%arg0: i32) -> (i32, i32) {
    %c0_i32 = arith.constant 0 : i32
    %c0_i32_0 = arith.constant 0 : i32
    return %arg0, %c0_i32 : i32, i32
  }
}

</mosaic_0001>

<llo_original>
// kernel: net_forward.1
$region0: #{net_forward.1}
  #allocation0 [shape = 'u32[]', space=smem, size = 0x4, offset = 0x4, fixed_abs, tag = 'smem constant byte address 0x4 - core index']
  #allocation1 [shape = 'u32[144,128]{1,0:T(1,128)}', space=vmem, size = 0x12000, scoped, tag = 'internal scratch']
  %s0 = inlined_call_operand.vmem [shape: f32[16,32], index: 0, kind: input, shape index: {}]
  %s1 = inlined_call_operand.vmem [shape: f32[1,32], index: 1, kind: input, shape index: {}]
  %s2 = inlined_call_operand.vmem [shape: f32[1,32], index: 2, kind: input, shape index: {}]
  %s3 = inlined_call_operand.hbm [shape: bf16[32,1024], index: 3, kind: input, shape index: {}]
  %s4 = inlined_call_operand.hbm [shape: f32[1,1024], index: 4, kind: input, shape index: {}]
  %s5 = inlined_call_operand.hbm [shape: bf16[1024,512], index: 5, kind: input, shape index: {}]
  %s6 = inlined_call_operand.hbm [shape: f32[1,512], index: 6, kind: input, shape index: {}]
  %s7 = inlined_call_operand.hbm [shape: bf16[512,128], index: 7, kind: input, shape index: {}]
  %s8 = inlined_call_operand.vmem [shape: f32[1,128], index: 8, kind: input, shape index: {}]
  %s9 = inlined_call_operand.vmem [shape: bf16[128,128], index: 9, kind: input, shape index: {}]
  %s10 = inlined_call_operand.hbm [shape: f32[1,128], index: 10, kind: input, shape index: {}]
  %s11 = inlined_call_operand.vmem [shape: f32[16,128], index: 11, kind: output, shape index: {}]
  %s12 = sld [smem:[#allocation0]]
  $region78: #{net_forward.1} parent=0
    _
  %s14 = ssub.s32 1, %s12
  %s15 = scalar_select 0, %s14, %s12
  $region1: #{net_forward.1} parent=0
    #allocation2 [shape = 'u8[65536]{0}', space=vmem, size = 0x10000, scoped, tag = 'input window, operand 3, single buffered']
    #allocation3 [shape = 's32[1]{0}', space=sflag, size = 0x4, scoped, tag = 'scoped memory for net_forward.1']
    #allocation4 [shape = 'u8[4096]{0}', space=vmem, size = 0x1000, scoped, tag = 'input window, operand 4, single buffered']
    #allocation5 [shape = 's32[1]{0}', space=sflag, size = 0x4, scoped, tag = 'scoped memory for net_forward.1']
    #allocation6 [shape = 'u8[1048576]{0}', space=vmem, size = 0x100000, scoped, tag = 'input window, operand 5, single buffered']
    #allocation7 [shape = 'u8[2048]{0}', space=vmem, size = 0x800, scoped, tag = 'input window, operand 6, single buffered']
    #allocation8 [shape = 's32[1]{0}', space=sflag, size = 0x4, scoped, tag = 'scoped memory for net_forward.1']
    #allocation9 [shape = 'u8[131072]{0}', space=vmem, size = 0x20000, scoped, tag = 'input window, operand 7, single buffered']
    #allocation10 [shape = 'u8[512]{0}', space=vmem, size = 0x400, scoped, tag = 'input window, operand 10, single buffered']
    #allocation11 [shape = 's32[1]{0}', space=sflag, size = 0x4, scoped, tag = 'scoped memory for net_forward.1']
    %16 = vsyncpa [#allocation3], 0
    %17 = vsyncpa [#allocation5], 0
    %18 = vsyncpa [#allocation8], 0
    %19 = vsyncpa [#allocation11], 0
    // Predicated region
    $region2: #{net_forward.1} parent=1 // pred_check
      _
    $region3: #{net_forward.1} parent=1 // pred_check_branch
      %21 = sbr.rel (0) target = $region5
    $region4: #{net_forward.1} parent=1 // pred_region
      _
    $region5: #{net_forward.1} parent=1 // pred_fallthru
      _
    // Predicated region
    $region6: #{net_forward.1} parent=1 // pred_check
      _
    $region7: #{net_forward.1} parent=1 // pred_check_branch
      %23 = sbr.rel (0) target = $region9
    $region8: #{net_forward.1} parent=1 // pred_region
      _
    $region9: #{net_forward.1} parent=1 // pred_fallthru
      _
    // Predicated region
    $region10: #{net_forward.1} parent=1 // pred_check
      _
    $region11: #{net_forward.1} parent=1 // pred_check_branch
      %25 = sbr.rel (0) target = $region13
    $region12: #{net_forward.1} parent=1 // pred_region
      _
    $region13: #{net_forward.1} parent=1 // pred_fallthru
      _
    // Predicated region
    $region14: #{net_forward.1} parent=1 // pred_check
      _
    $region15: #{net_forward.1} parent=1 // pred_check_branch
      %27 = sbr.rel (0) target = $region17
    $region16: #{net_forward.1} parent=1 // pred_region
      %s29 = ssub.s32 2048, 2048
      %30 = vsyncadd [#allocation3], %s29
      %s31 = sshll.u32 [#allocation2], 4
      %s32 = int_to_ptr.vmem [resolvable:$true] %s31
      %37 = dma.hbm_to_vmem [thread:$0]  %s3, 2048, %s32, [#allocation3], 512, 512, 32
    $region17: #{net_forward.1} parent=1 // pred_fallthru
      _
    // Predicated region
    $region18: #{net_forward.1} parent=1 // pred_check
      _
    $region19: #{net_forward.1} parent=1 // pred_check_branch
      %39 = sbr.rel (0) target = $region21
    $region20: #{net_forward.1} parent=1 // pred_region
      %s41 = ssub.s32 128, 128
      %42 = vsyncadd [#allocation5], %s41
      %s44 = sshll.u32 [#allocation4], 4
      %s45 = int_to_ptr.vmem [resolvable:$true] %s44
      %47 = dma.hbm_to_vmem [thread:$0]  %s4, 128, %s45, [#allocation5]
    $region21: #{net_forward.1} parent=1 // pred_fallthru
      _
    // Predicated region
    $region22: #{net_forward.1} parent=1 // pred_check
      _
    $region23: #{net_forward.1} parent=1 // pred_check_branch
      %49 = sbr.rel (0) target = $region25
    $region24: #{net_forward.1} parent=1 // pred_region
      %s51 = ssub.s32 32768, 32768
      %52 = vsyncadd [#allocation5], %s51
      %s53 = sshll.u32 [#allocation6], 4
      %s54 = int_to_ptr.vmem [resolvable:$true] %s53
      %59 = dma.hbm_to_vmem [thread:$0]  %s5, 32768, %s54, [#allocation5], 256, 256, 16
    $region25: #{net_forward.1} parent=1 // pred_fallthru
      _
    // Predicated region
    $region26: #{net_forward.1} parent=1 // pred_check
      _
    $region27: #{net_forward.1} parent=1 // pred_check_branch
      %61 = sbr.rel (0) target = $region29
    $region28: #{net_forward.1} parent=1 // pred_region
      %s63 = ssub.s32 64, 64
      %64 = vsyncadd [#allocation8], %s63
      %s66 = sshll.u32 [#allocation7], 4
      %s67 = int_to_ptr.vmem [resolvable:$true] %s66
      %69 = dma.hbm_to_vmem [thread:$0]  %s6, 64, %s67, [#allocation8]
    $region29: #{net_forward.1} parent=1 // pred_fallthru
      _
    // Predicated region
    $region30: #{net_forward.1} parent=1 // pred_check
      _
    $region31: #{net_forward.1} parent=1 // pred_check_branch
      %71 = sbr.rel (0) target = $region33
    $region32: #{net_forward.1} parent=1 // pred_region
      %s73 = ssub.s32 4096, 4096
      %74 = vsyncadd [#allocation8], %s73
      %s75 = sshll.u32 [#allocation9], 4
      %s76 = int_to_ptr.vmem [resolvable:$true] %s75
      %81 = dma.hbm_to_vmem [thread:$0]  %s7, 4096, %s76, [#allocation8], 64, 64, 4
    $region33: #{net_forward.1} parent=1 // pred_fallthru
      _
    // Predicated region
    $region34: #{net_forward.1} parent=1 // pred_check
      _
    $region35: #{net_forward.1} parent=1 // pred_check_branch
      %83 = sbr.rel (0) target = $region37
    $region36: #{net_forward.1} parent=1 // pred_region
      _
    $region37: #{net_forward.1} parent=1 // pred_fallthru
      _
    // Predicated region
    $region38: #{net_forward.1} parent=1 // pred_check
      _
    $region39: #{net_forward.1} parent=1 // pred_check_branch
      %85 = sbr.rel (0) target = $region41
    $region40: #{net_forward.1} parent=1 // pred_region
      _
    $region41: #{net_forward.1} parent=1 // pred_fallthru
      _
    // Predicated region
    $region42: #{net_forward.1} parent=1 // pred_check
      _
    $region43: #{net_forward.1} parent=1 // pred_check_branch
      %87 = sbr.rel (0) target = $region45
    $region44: #{net_forward.1} parent=1 // pred_region
      %s89 = ssub.s32 16, 16
      %90 = vsyncadd [#allocation11], %s89
      %s92 = sshll.u32 [#allocation10], 4
      %s93 = int_to_ptr.vmem [resolvable:$true] %s92
      %95 = dma.hbm_to_vmem [thread:$0]  %s10, 16, %s93, [#allocation11]
    $region45: #{net_forward.1} parent=1 // pred_fallthru
      _
    // Predicated region
    $region46: #{net_forward.1} parent=1 // pred_check
      _
    $region47: #{net_forward.1} parent=1 // pred_check_branch
      %97 = sbr.rel (0) target = $region49
    $region48: #{net_forward.1} parent=1 // pred_region
      %98 = dma.done [#allocation3], 2048
    $region49: #{net_forward.1} parent=1 // pred_fallthru
      _
    // Predicated region
    $region50: #{net_forward.1} parent=1 // pred_check
      _
    $region51: #{net_forward.1} parent=1 // pred_check_branch
      %100 = sbr.rel (0) target = $region53
    $region52: #{net_forward.1} parent=1 // pred_region
      %101 = dma.done [#allocation5], 128
    $region53: #{net_forward.1} parent=1 // pred_fallthru
      _
    // Predicated region
    $region54: #{net_forward.1} parent=1 // pred_check
      _
    $region55: #{net_forward.1} parent=1 // pred_check_branch
      %103 = sbr.rel (0) target = $region57
    $region56: #{net_forward.1} parent=1 // pred_region
      %104 = dma.done [#allocation5], 32768
    $region57: #{net_forward.1} parent=1 // pred_fallthru
      _
    // Predicated region
    $region58: #{net_forward.1} parent=1 // pred_check
      _
    $region59: #{net_forward.1} parent=1 // pred_check_branch
      %106 = sbr.rel (0) target = $region61
    $region60: #{net_forward.1} parent=1 // pred_region
      %107 = dma.done [#allocation8], 64
    $region61: #{net_forward.1} parent=1 // pred_fallthru
      _
    // Predicated region
    $region62: #{net_forward.1} parent=1 // pred_check
      _
    $region63: #{net_forward.1} parent=1 // pred_check_branch
      %109 = sbr.rel (0) target = $region65
    $region64: #{net_forward.1} parent=1 // pred_region
      %110 = dma.done [#allocation8], 4096
    $region65: #{net_forward.1} parent=1 // pred_fallthru
      _
    // Predicated region
    $region66: #{net_forward.1} parent=1 // pred_check
      _
    $region67: #{net_forward.1} parent=1 // pred_check_branch
      %112 = sbr.rel (0) target = $region69
    $region68: #{net_forward.1} parent=1 // pred_region
      %113 = dma.done [#allocation11], 16
    $region69: #{net_forward.1} parent=1 // pred_fallthru
      _
    %v115 = vld [vmem:[%s0] sm:$0xff]
    %v116 = vld [vmem:[%s0 + $0x8] sm:$0xff]
    %v117 = vld [vmem:[%s1] sm:$0x1]
    %v119 = vlaneseq
    %v120 = vshrl.u32 %v119, 7
    %v121 = vsub.s32 0, %v120
    %v122 = vrot.slane %v117, %v121
    %v124 = vmul.f32 %v115, %v122
    %v125 = vmul.f32 %v116, %v122
    %v126 = vld [vmem:[%s2] sm:$0x1]
    %v128 = vlaneseq
    %v129 = vshrl.u32 %v128, 7
    %v130 = vsub.s32 0, %v129
    %v131 = vrot.slane %v126, %v130
    %v133 = vadd.f32 %v124, %v131
    %v134 = vadd.f32 %v125, %v131
    %v135 = vpack.c.bf16 %v134, %v133
    %v136 = vld [vmem:[#allocation2] sm:$0xff]
    %v137 = vld [vmem:[#allocation2 + $0x8] sm:$0xff]
    %v138 = vld [vmem:[#allocation2 + $0x10] sm:$0xff]
    %v139 = vld [vmem:[#allocation2 + $0x18] sm:$0xff]
    %v140 = vld [vmem:[#allocation2 + $0x20] sm:$0xff]
    %v141 = vld [vmem:[#allocation2 + $0x28] sm:$0xff]
    %v142 = vld [vmem:[#allocation2 + $0x30] sm:$0xff]
    %v143 = vld [vmem:[#allocation2 + $0x38] sm:$0xff]
    %v144 = vld [vmem:[#allocation2 + $0x40] sm:$0xff]
    %v145 = vld [vmem:[#allocation2 + $0x48] sm:$0xff]
    %v146 = vld [vmem:[#allocation2 + $0x50] sm:$0xff]
    %v147 = vld [vmem:[#allocation2 + $0x58] sm:$0xff]
    %v148 = vld [vmem:[#allocation2 + $0x60] sm:$0xff]
    %v149 = vld [vmem:[#allocation2 + $0x68] sm:$0xff]
    %v150 = vld [vmem:[#allocation2 + $0x70] sm:$0xff]
    %v151 = vld [vmem:[#allocation2 + $0x78] sm:$0xff]
    %v152 = vld [vmem:[#allocation4] sm:$0xff]
    %v154 = vlaneseq
    %v155 = vshrl.u32 %v154, 7
    %v156 = vsub.s32 0, %v155
    %v157 = vrot.slane %v152, %v156
    %v158 = vlaneseq
    %v159 = vshrl.u32 %v158, 7
    %v160 = vsub.s32 1, %v159
    %v161 = vrot.slane %v152, %v160
    %v162 = vlaneseq
    %v163 = vshrl.u32 %v162, 7
    %v164 = vsub.s32 2, %v163
    %v165 = vrot.slane %v152, %v164
    %v166 = vlaneseq
    %v167 = vshrl.u32 %v166, 7
    %v168 = vsub.s32 3, %v167
    %v169 = vrot.slane %v152, %v168
    %v170 = vlaneseq
    %v171 = vshrl.u32 %v170, 7
    %v172 = vsub.s32 4, %v171
    %v173 = vrot.slane %v152, %v172
    %v174 = vlaneseq
    %v175 = vshrl.u32 %v174, 7
    %v176 = vsub.s32 5, %v175
    %v177 = vrot.slane %v152, %v176
    %v178 = vlaneseq
    %v179 = vshrl.u32 %v178, 7
    %v180 = vsub.s32 6, %v179
    %v181 = vrot.slane %v152, %v180
    %v182 = vlaneseq
    %v183 = vshrl.u32 %v182, 7
    %v184 = vsub.s32 7, %v183
    %v185 = vrot.slane %v152, %v184
    %v210 = vunpack.c.l.b16 %v136
    %v211 = vunpack.c.h.b16 %v136
    %v212 = vunpack.c.l.b16 %v137
    %v213 = vunpack.c.h.b16 %v137
    %v214 = vunpack.c.l.b16 %v138
    %v215 = vunpack.c.h.b16 %v138
    %v216 = vunpack.c.l.b16 %v139
    %v217 = vunpack.c.h.b16 %v139
    %v218 = vunpack.c.l.b16 %v140
    %v219 = vunpack.c.h.b16 %v140
    %v220 = vunpack.c.l.b16 %v141
    %v221 = vunpack.c.h.b16 %v141
    %v222 = vunpack.c.l.b16 %v142
    %v223 = vunpack.c.h.b16 %v142
    %v224 = vunpack.c.l.b16 %v143
    %v225 = vunpack.c.h.b16 %v143
    %v226 = vunpack.c.l.b16 %v144
    %v227 = vunpack.c.h.b16 %v144
    %v228 = vunpack.c.l.b16 %v145
    %v229 = vunpack.c.h.b16 %v145
    %v230 = vunpack.c.l.b16 %v146
    %v231 = vunpack.c.h.b16 %v146
    %v232 = vunpack.c.l.b16 %v147
    %v233 = vunpack.c.h.b16 %v147
    %v234 = vunpack.c.l.b16 %v148
    %v235 = vunpack.c.h.b16 %v148
    %v236 = vunpack.c.l.b16 %v149
    %v237 = vunpack.c.h.b16 %v149
    %v238 = vunpack.c.l.b16 %v150
    %v239 = vunpack.c.h.b16 %v150
    %v240 = vunpack.c.l.b16 %v151
    %v241 = vunpack.c.h.b16 %v151
    %v242 = vpack.c.b16 %v218, %v210
    %v243 = vpack.c.b16 %v219, %v211
    %v244 = vpack.c.b16 %v220, %v212
    %v245 = vpack.c.b16 %v221, %v213
    %v246 = vpack.c.b16 %v222, %v214
    %v247 = vpack.c.b16 %v223, %v215
    %v248 = vpack.c.b16 %v224, %v216
    %v249 = vpack.c.b16 %v225, %v217
    %v250 = vpack.c.b16 %v234, %v226
    %v251 = vpack.c.b16 %v235, %v227
    %v252 = vpack.c.b16 %v236, %v228
    %v253 = vpack.c.b16 %v237, %v229
    %v254 = vpack.c.b16 %v238, %v230
    %v255 = vpack.c.b16 %v239, %v231
    %v256 = vpack.c.b16 %v240, %v232
    %v257 = vpack.c.b16 %v241, %v233
    %vm274 = vcmask 261120
    %v276 = vsel %vm274, %v135, 0
    %278 = vmatprep.subr.bf16.mxu0 0
    %279 = vmatpush1.bf16.msra.mxu0 0
    %280 = vmatprep.subr.bf16.mxu0 0
    %281 = vmatpush1.bf16.msra.mxu0 0
    %282 = vmatprep.subr.bf16.mxu0 0
    %283 = vmatpush1.bf16.msra.mxu0 0
    %284 = vmatprep.subr.bf16.mxu0 0
    %285 = vmatpush1.bf16.msra.mxu0 0
    %286 = vmatprep.subr.bf16.mxu0 0
    %287 = vmatpush1.bf16.msra.mxu0 0
    %288 = vmatprep.subr.bf16.mxu0 0
    %289 = vmatpush1.bf16.msra.mxu0 0
    %290 = vmatprep.subr.bf16.mxu0 %v251
    %291 = vmatpush1.bf16.msra.mxu0 %v250
    %292 = vmatprep.subr.bf16.mxu0 %v243
    %293 = vmatpush1.bf16.msra.mxu0 %v242
    %294 = vmatprep.subr.bf16.mxu0 0
    %295 = vmatpush2.bf16.msra.mxu0 0
    %296 = vmatprep.subr.bf16.mxu0 0
    %297 = vmatpush2.bf16.msra.mxu0 0
    %298 = vmatprep.subr.bf16.mxu0 0
    %299 = vmatpush2.bf16.msra.mxu0 0
    %300 = vmatprep.subr.bf16.mxu0 0
    %301 = vmatpush2.bf16.msra.mxu0 0
    %302 = vmatprep.subr.bf16.mxu0 0
    %303 = vmatpush2.bf16.msra.mxu0 0
    %304 = vmatprep.subr.bf16.mxu0 0
    %305 = vmatpush2.bf16.msra.mxu0 0
    %306 = vmatprep.subr.bf16.mxu0 0
    %307 = vmatpush2.bf16.msra.mxu0 0
    %308 = vmatprep.subr.bf16.mxu0 0
    %309 = vmatpush2.bf16.msra.mxu0 0
    %310 = vmatprep.mubr.bf16.mxu0 0
    %311 = vmatmul.mubr.bf16.gmra.mxu0 %v276
    %v312 = vpop.f32.mrf.mxu0
    %v313 = vadd.f32 %v157, %v312
    %v314 = vpop.f32.mrf.mxu0
    %v315 = vadd.f32 %v161, %v314
    %v316 = vpop.f32.mrf.mxu0
    %v317 = vadd.f32 %v157, %v316
    %v318 = vpop.f32.mrf.mxu0
    %v319 = vadd.f32 %v161, %v318
    %320 = vdwg.mxu0
    %321 = vmatprep.subr.bf16.mxu0 0
    %322 = vmatpush1.bf16.msra.mxu0 0
    %323 = vmatprep.subr.bf16.mxu0 0
    %324 = vmatpush1.bf16.msra.mxu0 0
    %325 = vmatprep.subr.bf16.mxu0 0
    %326 = vmatpush1.bf16.msra.mxu0 0
    %327 = vmatprep.subr.bf16.mxu0 0
    %328 = vmatpush1.bf16.msra.mxu0 0
    %329 = vmatprep.subr.bf16.mxu0 0
    %330 = vmatpush1.bf16.msra.mxu0 0
    %331 = vmatprep.subr.bf16.mxu0 0
    %332 = vmatpush1.bf16.msra.mxu0 0
    %333 = vmatprep.subr.bf16.mxu0 %v253
    %334 = vmatpush1.bf16.msra.mxu0 %v252
    %335 = vmatprep.subr.bf16.mxu0 %v245
    %336 = vmatpush1.bf16.msra.mxu0 %v244
    %337 = vmatprep.subr.bf16.mxu0 0
    %338 = vmatpush2.bf16.msra.mxu0 0
    %339 = vmatprep.subr.bf16.mxu0 0
    %340 = vmatpush2.bf16.msra.mxu0 0
    %341 = vmatprep.subr.bf16.mxu0 0
    %342 = vmatpush2.bf16.msra.mxu0 0
    %343 = vmatprep.subr.bf16.mxu0 0
    %344 = vmatpush2.bf16.msra.mxu0 0
    %345 = vmatprep.subr.bf16.mxu0 0
    %346 = vmatpush2.bf16.msra.mxu0 0
    %347 = vmatprep.subr.bf16.mxu0 0
    %348 = vmatpush2.bf16.msra.mxu0 0
    %349 = vmatprep.subr.bf16.mxu0 0
    %350 = vmatpush2.bf16.msra.mxu0 0
    %351 = vmatprep.subr.bf16.mxu0 0
    %352 = vmatpush2.bf16.msra.mxu0 0
    %353 = vmatprep.mubr.bf16.mxu0 0
    %354 = vmatmul.mubr.bf16.gmra.mxu0 %v276
    %v355 = vpop.f32.mrf.mxu0
    %v356 = vadd.f32 %v165, %v355
    %v357 = vpop.f32.mrf.mxu0
    %v358 = vadd.f32 %v169, %v357
    %v359 = vpop.f32.mrf.mxu0
    %v360 = vadd.f32 %v165, %v359
    %v361 = vpop.f32.mrf.mxu0
    %v362 = vadd.f32 %v169, %v361
    %363 = vdwg.mxu0
    %364 = vmatprep.subr.bf16.mxu0 0
    %365 = vmatpush1.bf16.msra.mxu0 0
    %366 = vmatprep.subr.bf16.mxu0 0
    %367 = vmatpush1.bf16.msra.mxu0 0
    %368 = vmatprep.subr.bf16.mxu0 0
    %369 = vmatpush1.bf16.msra.mxu0 0
    %370 = vmatprep.subr.bf16.mxu0 0
    %371 = vmatpush1.bf16.msra.mxu0 0
    %372 = vmatprep.subr.bf16.mxu0 0
    %373 = vmatpush1.bf16.msra.mxu0 0
    %374 = vmatprep.subr.bf16.mxu0 0
    %375 = vmatpush1.bf16.msra.mxu0 0
    %376 = vmatprep.subr.bf16.mxu0 %v255
    %377 = vmatpush1.bf16.msra.mxu0 %v254
    %378 = vmatprep.subr.bf16.mxu0 %v247
    %379 = vmatpush1.bf16.msra.mxu0 %v246
    %380 = vmatprep.subr.bf16.mxu0 0
    %381 = vmatpush2.bf16.msra.mxu0 0
    %382 = vmatprep.subr.bf16.mxu0 0
    %383 = vmatpush2.bf16.msra.mxu0 0
    %384 = vmatprep.subr.bf16.mxu0 0
    %385 = vmatpush2.bf16.msra.mxu0 0
    %386 = vmatprep.subr.bf16.mxu0 0
    %387 = vmatpush2.bf16.msra.mxu0 0
    %388 = vmatprep.subr.bf16.mxu0 0
    %389 = vmatpush2.bf16.msra.mxu0 0
    %390 = vmatprep.subr.bf16.mxu0 0
    %391 = vmatpush2.bf16.msra.mxu0 0
    %392 = vmatprep.subr.bf16.mxu0 0
    %393 = vmatpush2.bf16.msra.mxu0 0
    %394 = vmatprep.subr.bf16.mxu0 0
    %395 = vmatpush2.bf16.msra.mxu0 0
    %396 = vmatprep.mubr.bf16.mxu0 0
    %397 = vmatmul.mubr.bf16.gmra.mxu0 %v276
    %v398 = vpop.f32.mrf.mxu0
    %v399 = vadd.f32 %v173, %v398
    %v400 = vpop.f32.mrf.mxu0
    %v401 = vadd.f32 %v177, %v400
    %v402 = vpop.f32.mrf.mxu0
    %v403 = vadd.f32 %v173, %v402
    %v404 = vpop.f32.mrf.mxu0
    %v405 = vadd.f32 %v177, %v404
    %406 = vdwg.mxu0
    %407 = vmatprep.subr.bf16.mxu0 0
    %408 = vmatpush1.bf16.msra.mxu0 0
    %409 = vmatprep.subr.bf16.mxu0 0
    %410 = vmatpush1.bf16.msra.mxu0 0
    %411 = vmatprep.subr.bf16.mxu0 0
    %412 = vmatpush1.bf16.msra.mxu0 0
    %413 = vmatprep.subr.bf16.mxu0 0
    %414 = vmatpush1.bf16.msra.mxu0 0
    %415 = vmatprep.subr.bf16.mxu0 0
    %416 = vmatpush1.bf16.msra.mxu0 0
    %417 = vmatprep.subr.bf16.mxu0 0
    %418 = vmatpush1.bf16.msra.mxu0 0
    %419 = vmatprep.subr.bf16.mxu0 %v257
    %420 = vmatpush1.bf16.msra.mxu0 %v256
    %421 = vmatprep.subr.bf16.mxu0 %v249
    %422 = vmatpush1.bf16.msra.mxu0 %v248
    %423 = vmatprep.subr.bf16.mxu0 0
    %424 = vmatpush2.bf16.msra.mxu0 0
    %425 = vmatprep.subr.bf16.mxu0 0
    %426 = vmatpush2.bf16.msra.mxu0 0
    %427 = vmatprep.subr.bf16.mxu0 0
    %428 = vmatpush2.bf16.msra.mxu0 0
    %429 = vmatprep.subr.bf16.mxu0 0
    %430 = vmatpush2.bf16.msra.mxu0 0
    %431 = vmatprep.subr.bf16.mxu0 0
    %432 = vmatpush2.bf16.msra.mxu0 0
    %433 = vmatprep.subr.bf16.mxu0 0
    %434 = vmatpush2.bf16.msra.mxu0 0
    %435 = vmatprep.subr.bf16.mxu0 0
    %436 = vmatpush2.bf16.msra.mxu0 0
    %437 = vmatprep.subr.bf16.mxu0 0
    %438 = vmatpush2.bf16.msra.mxu0 0
    %439 = vmatprep.mubr.bf16.mxu0 0
    %440 = vmatmul.mubr.bf16.gmra.mxu0 %v276
    %v441 = vpop.f32.mrf.mxu0
    %v442 = vadd.f32 %v181, %v441
    %v443 = vpop.f32.mrf.mxu0
    %v444 = vadd.f32 %v185, %v443
    %v445 = vpop.f32.mrf.mxu0
    %v446 = vadd.f32 %v181, %v445
    %v447 = vpop.f32.mrf.mxu0
    %v448 = vadd.f32 %v185, %v447
    %449 = vdwg.mxu0
    %v450 = vmax.f32 %v313, 0.0
    %v451 = vmax.f32 %v315, 0.0
    %v452 = vmax.f32 %v356, 0.0
    %v453 = vmax.f32 %v358, 0.0
    %v454 = vmax.f32 %v399, 0.0
    %v455 = vmax.f32 %v401, 0.0
    %v456 = vmax.f32 %v442, 0.0
    %v457 = vmax.f32 %v444, 0.0
    %v458 = vmax.f32 %v317, 0.0
    %v459 = vmax.f32 %v319, 0.0
    %v460 = vmax.f32 %v360, 0.0
    %v461 = vmax.f32 %v362, 0.0
    %v462 = vmax.f32 %v403, 0.0
    %v463 = vmax.f32 %v405, 0.0
    %v464 = vmax.f32 %v446, 0.0
    %v465 = vmax.f32 %v448, 0.0
    %v466 = vpack.c.bf16 %v458, %v450
    %v467 = vpack.c.bf16 %v459, %v451
    %v468 = vpack.c.bf16 %v460, %v452
    %v469 = vpack.c.bf16 %v461, %v453
    %v470 = vpack.c.bf16 %v462, %v454
    %v471 = vpack.c.bf16 %v463, %v455
    %v472 = vpack.c.bf16 %v464, %v456
    %v473 = vpack.c.bf16 %v465, %v457
    %v474 = vld [vmem:[#allocation6] sm:$0xff]
    %v475 = vld [vmem:[#allocation6 + $0x8] sm:$0xff]
    %v476 = vld [vmem:[#allocation6 + $0x10] sm:$0xff]
    %v477 = vld [vmem:[#allocation6 + $0x18] sm:$0xff]
    %v478 = vld [vmem:[#allocation6 + $0x20] sm:$0xff]
    %v479 = vld [vmem:[#allocation6 + $0x28] sm:$0xff]
    %v480 = vld [vmem:[#allocation6 + $0x30] sm:$0xff]
    %v481 = vld [vmem:[#allocation6 + $0x38] sm:$0xff]
    %v482 = vld [vmem:[#allocation6 + $0x40] sm:$0xff]
    %v483 = vld [vmem:[#allocation6 + $0x48] sm:$0xff]
    %v484 = vld [vmem:[#allocation6 + $0x50] sm:$0xff]
    %v485 = vld [vmem:[#allocation6 + $0x58] sm:$0xff]
    %v486 = vld [vmem:[#allocation6 + $0x60] sm:$0xff]
    %v487 = vld [vmem:[#allocation6 + $0x68] sm:$0xff]
    %v488 = vld [vmem:[#allocation6 + $0x70] sm:$0xff]
    %v489 = vld [vmem:[#allocation6 + $0x78] sm:$0xff]
    %v490 = vld [vmem:[#allocation6 + $0x80] sm:$0xff]
    %v491 = vld [vmem:[#allocation6 + $0x88] sm:$0xff]
    %v492 = vld [vmem:[#allocation6 + $0x90] sm:$0xff]
    %v493 = vld [vmem:[#allocation6 + $0x98] sm:$0xff]
    %v494 = vld [vmem:[#allocation6 + $0xa0] sm:$0xff]
    %v495 = vld [vmem:[#allocation6 + $0xa8] sm:$0xff]
    %v496 = vld [vmem:[#allocation6 + $0xb0] sm:$0xff]
    %v497 = vld [vmem:[#allocation6 + $0xb8] sm:$0xff]
    %v498 = vld [vmem:[#allocation6 + $0xc0] sm:$0xff]
    %v499 = vld [vmem:[#allocation6 + $0xc8] sm:$0xff]
    %v500 = vld [vmem:[#allocation6 + $0xd0] sm:$0xff]
    %v501 = vld [vmem:[#allocation6 + $0xd8] sm:$0xff]
    %v502 = vld [vmem:[#allocation6 + $0xe0] sm:$0xff]
    %v503 = vld [vmem:[#allocation6 + $0xe8] sm:$0xff]
    %v504 = vld [vmem:[#allocation6 + $0xf0] sm:$0xff]
    %v505 = vld [vmem:[#allocation6 + $0xf8] sm:$0xff]
    %v506 = vld [vmem:[#allocation6 + $0x100] sm:$0xff]
    %v507 = vld [vmem:[#allocation6 + $0x108] sm:$0xff]
    %v508 = vld [vmem:[#allocation6 + $0x110] sm:$0xff]
    %v509 = vld [vmem:[#allocation6 + $0x118] sm:$0xff]
    %v510 = vld [vmem:[#allocation6 + $0x120] sm:$0xff]
    %v511 = vld [vmem:[#allocation6 + $0x128] sm:$0xff]
    %v512 = vld [vmem:[#allocation6 + $0x130] sm:$0xff]
    %v513 = vld [vmem:[#allocation6 + $0x138] sm:$0xff]
    %v514 = vld [vmem:[#allocation6 + $0x140] sm:$0xff]
    %v515 = vld [vmem:[#allocation6 + $0x148] sm:$0xff]
    %v516 = vld [vmem:[#allocation6 + $0x150] sm:$0xff]
    %v517 = vld [vmem:[#allocation6 + $0x158] sm:$0xff]
    %v518 = vld [vmem:[#allocation6 + $0x160] sm:$0xff]
    %v519 = vld [vmem:[#allocation6 + $0x168] sm:$0xff]
    %v520 = vld [vmem:[#allocation6 + $0x170] sm:$0xff]
    %v521 = vld [vmem:[#allocation6 + $0x178] sm:$0xff]
    %v522 = vld [vmem:[#allocation6 + $0x180] sm:$0xff]
    %v523 = vld [vmem:[#allocation6 + $0x188] sm:$0xff]
    %v524 = vld [vmem:[#allocation6 + $0x190] sm:$0xff]
    %v525 = vld [vmem:[#allocation6 + $0x198] sm:$0xff]
    %v526 = vld [vmem:[#allocation6 + $0x1a0] sm:$0xff]
    %v527 = vld [vmem:[#allocation6 + $0x1a8] sm:$0xff]
    %v528 = vld [vmem:[#allocation6 + $0x1b0] sm:$0xff]
    %v529 = vld [vmem:[#allocation6 + $0x1b8] sm:$0xff]
    %v530 = vld [vmem:[#allocation6 + $0x1c0] sm:$0xff]
    %v531 = vld [vmem:[#allocation6 + $0x1c8] sm:$0xff]
    %v532 = vld [vmem:[#allocation6 + $0x1d0] sm:$0xff]
    %v533 = vld [vmem:[#allocation6 + $0x1d8] sm:$0xff]
    %v534 = vld [vmem:[#allocation6 + $0x1e0] sm:$0xff]
    %v535 = vld [vmem:[#allocation6 + $0x1e8] sm:$0xff]
    %v536 = vld [vmem:[#allocation6 + $0x1f0] sm:$0xff]
    %v537 = vld [vmem:[#allocation6 + $0x1f8] sm:$0xff]
    %v538 = vld [vmem:[#allocation6 + $0x200] sm:$0xff]
    %v539 = vld [vmem:[#allocation6 + $0x208] sm:$0xff]
    %v540 = vld [vmem:[#allocation6 + $0x210] sm:$0xff]
    %v541 = vld [vmem:[#allocation6 + $0x218] sm:$0xff]
    %v542 = vld [vmem:[#allocation6 + $0x220] sm:$0xff]
    %v543 = vld [vmem:[#allocation6 + $0x228] sm:$0xff]
    %v544 = vld [vmem:[#allocation6 + $0x230] sm:$0xff]
    %v545 = vld [vmem:[#allocation6 + $0x238] sm:$0xff]
    %v546 = vld [vmem:[#allocation6 + $0x240] sm:$0xff]
    %v547 = vld [vmem:[#allocation6 + $0x248] sm:$0xff]
    %v548 = vld [vmem:[#allocation6 + $0x250] sm:$0xff]
    %v549 = vld [vmem:[#allocation6 + $0x258] sm:$0xff]
    %v550 = vld [vmem:[#allocation6 + $0x260] sm:$0xff]
    %v551 = vld [vmem:[#allocation6 + $0x268] sm:$0xff]
    %v552 = vld [vmem:[#allocation6 + $0x270] sm:$0xff]
    %v553 = vld [vmem:[#allocation6 + $0x278] sm:$0xff]
    %v554 = vld [vmem:[#allocation6 + $0x280] sm:$0xff]
    %v555 = vld [vmem:[#allocation6 + $0x288] sm:$0xff]
    %v556 = vld [vmem:[#allocation6 + $0x290] sm:$0xff]
    %v557 = vld [vmem:[#allocation6 + $0x298] sm:$0xff]
    %v558 = vld [vmem:[#allocation6 + $0x2a0] sm:$0xff]
    %v559 = vld [vmem:[#allocation6 + $0x2a8] sm:$0xff]
    %v560 = vld [vmem:[#allocation6 + $0x2b0] sm:$0xff]
    %v561 = vld [vmem:[#allocation6 + $0x2b8] sm:$0xff]
    %v562 = vld [vmem:[#allocation6 + $0x2c0] sm:$0xff]
    %v563 = vld [vmem:[#allocation6 + $0x2c8] sm:$0xff]
    %v564 = vld [vmem:[#allocation6 + $0x2d0] sm:$0xff]
    %v565 = vld [vmem:[#allocation6 + $0x2d8] sm:$0xff]
    %v566 = vld [vmem:[#allocation6 + $0x2e0] sm:$0xff]
    %v567 = vld [vmem:[#allocation6 + $0x2e8] sm:$0xff]
    %v568 = vld [vmem:[#allocation6 + $0x2f0] sm:$0xff]
    %v569 = vld [vmem:[#allocation6 + $0x2f8] sm:$0xff]
    %v570 = vld [vmem:[#allocation6 + $0x300] sm:$0xff]
    %v571 = vld [vmem:[#allocation6 + $0x308] sm:$0xff]
    %v572 = vld [vmem:[#allocation6 + $0x310] sm:$0xff]
    %v573 = vld [vmem:[#allocation6 + $0x318] sm:$0xff]
    %v574 = vld [vmem:[#allocation6 + $0x320] sm:$0xff]
    %v575 = vld [vmem:[#allocation6 + $0x328] sm:$0xff]
    %v576 = vld [vmem:[#allocation6 + $0x330] sm:$0xff]
    %v577 = vld [vmem:[#allocation6 + $0x338] sm:$0xff]
    %v578 = vld [vmem:[#allocation6 + $0x340] sm:$0xff]
    %v579 = vld [vmem:[#allocation6 + $0x348] sm:$0xff]
    %v580 = vld [vmem:[#allocation6 + $0x350] sm:$0xff]
    %v581 = vld [vmem:[#allocation6 + $0x358] sm:$0xff]
    %v582 = vld [vmem:[#allocation6 + $0x360] sm:$0xff]
    %v583 = vld [vmem:[#allocation6 + $0x368] sm:$0xff]
    %v584 = vld [vmem:[#allocation6 + $0x370] sm:$0xff]
    %v585 = vld [vmem:[#allocation6 + $0x378] sm:$0xff]
    %v586 = vld [vmem:[#allocation6 + $0x380] sm:$0xff]
    %v587 = vld [vmem:[#allocation6 + $0x388] sm:$0xff]
    %v588 = vld [vmem:[#allocation6 + $0x390] sm:$0xff]
    %v589 = vld [vmem:[#allocation6 + $0x398] sm:$0xff]
    %v590 = vld [vmem:[#allocation6 + $0x3a0] sm:$0xff]
    %v591 = vld [vmem:[#allocation6 + $0x3a8] sm:$0xff]
    %v592 = vld [vmem:[#allocation6 + $0x3b0] sm:$0xff]
    %v593 = vld [vmem:[#allocation6 + $0x3b8] sm:$0xff]
    %v594 = vld [vmem:[#allocation6 + $0x3c0] sm:$0xff]
    %v595 = vld [vmem:[#allocation6 + $0x3c8] sm:$0xff]
    %v596 = vld [vmem:[#allocation6 + $0x3d0] sm:$0xff]
    %v597 = vld [vmem:[#allocation6 + $0x3d8] sm:$0xff]
    %v598 = vld [vmem:[#allocation6 + $0x3e0] sm:$0xff]
    %v599 = vld [vmem:[#allocation6 + $0x3e8] sm:$0xff]
    %v600 = vld [vmem:[#allocation6 + $0x3f0] sm:$0xff]
    %v601 = vld [vmem:[#allocation6 + $0x3f8] sm:$0xff]
    %v602 = vld [vmem:[#allocation6 + $0x400] sm:$0xff]
    %v603 = vld [vmem:[#allocation6 + $0x408] sm:$0xff]
    %v604 = vld [vmem:[#allocation6 + $0x410] sm:$0xff]
    %v605 = vld [vmem:[#allocation6 + $0x418] sm:$0xff]
    %v606 = vld [vmem:[#allocation6 + $0x420] sm:$0xff]
    %v607 = vld [vmem:[#allocation6 + $0x428] sm:$0xff]
    %v608 = vld [vmem:[#allocation6 + $0x430] sm:$0xff]
    %v609 = vld [vmem:[#allocation6 + $0x438] sm:$0xff]
    %v610 = vld [vmem:[#allocation6 + $0x440] sm:$0xff]
    %v611 = vld [vmem:[#allocation6 + $0x448] sm:$0xff]
    %v612 = vld [vmem:[#allocation6 + $0x450] sm:$0xff]
    %v613 = vld [vmem:[#allocation6 + $0x458] sm:$0xff]
    %v614 = vld [vmem:[#allocation6 + $0x460] sm:$0xff]
    %v615 = vld [vmem:[#allocation6 + $0x468] sm:$0xff]
    %v616 = vld [vmem:[#allocation6 + $0x470] sm:$0xff]
    %v617 = vld [vmem:[#allocation6 + $0x478] sm:$0xff]
    %v618 = vld [vmem:[#allocation6 + $0x480] sm:$0xff]
    %v619 = vld [vmem:[#allocation6 + $0x488] sm:$0xff]
    %v620 = vld [vmem:[#allocation6 + $0x490] sm:$0xff]
    %v621 = vld [vmem:[#allocation6 + $0x498] sm:$0xff]
    %v622 = vld [vmem:[#allocation6 + $0x4a0] sm:$0xff]
    %v623 = vld [vmem:[#allocation6 + $0x4a8] sm:$0xff]
    %v624 = vld [vmem:[#allocation6 + $0x4b0] sm:$0xff]
    %v625 = vld [vmem:[#allocation6 + $0x4b8] sm:$0xff]
    %v626 = vld [vmem:[#allocation6 + $0x4c0] sm:$0xff]
    %v627 = vld [vmem:[#allocation6 + $0x4c8] sm:$0xff]
    %v628 = vld [vmem:[#allocation6 + $0x4d0] sm:$0xff]
    %v629 = vld [vmem:[#allocation6 + $0x4d8] sm:$0xff]
    %v630 = vld [vmem:[#allocation6 + $0x4e0] sm:$0xff]
    %v631 = vld [vmem:[#allocation6 + $0x4e8] sm:$0xff]
    %v632 = vld [vmem:[#allocation6 + $0x4f0] sm:$0xff]
    %v633 = vld [vmem:[#allocation6 + $0x4f8] sm:$0xff]
    %v634 = vld [vmem:[#allocation6 + $0x500] sm:$0xff]
    %v635 = vld [vmem:[#allocation6 + $0x508] sm:$0xff]
    %v636 = vld [vmem:[#allocation6 + $0x510] sm:$0xff]
    %v637 = vld [vmem:[#allocation6 + $0x518] sm:$0xff]
    %v638 = vld [vmem:[#allocation6 + $0x520] sm:$0xff]
    %v639 = vld [vmem:[#allocation6 + $0x528] sm:$0xff]
    %v640 = vld [vmem:[#allocation6 + $0x530] sm:$0xff]
    %v641 = vld [vmem:[#allocation6 + $0x538] sm:$0xff]
    %v642 = vld [vmem:[#allocation6 + $0x540] sm:$0xff]
    %v643 = vld [vmem:[#allocation6 + $0x548] sm:$0xff]
    %v644 = vld [vmem:[#allocation6 + $0x550] sm:$0xff]
    %v645 = vld [vmem:[#allocation6 + $0x558] sm:$0xff]
    %v646 = vld [vmem:[#allocation6 + $0x560] sm:$0xff]
    %v647 = vld [vmem:[#allocation6 + $0x568] sm:$0xff]
    %v648 = vld [vmem:[#allocation6 + $0x570] sm:$0xff]
    %v649 = vld [vmem:[#allocation6 + $0x578] sm:$0xff]
    %v650 = vld [vmem:[#allocation6 + $0x580] sm:$0xff]
    %v651 = vld [vmem:[#allocation6 + $0x588] sm:$0xff]
    %v652 = vld [vmem:[#allocation6 + $0x590] sm:$0xff]
    %v653 = vld [vmem:[#allocation6 + $0x598] sm:$0xff]
    %v654 = vld [vmem:[#allocation6 + $0x5a0] sm:$0xff]
    %v655 = vld [vmem:[#allocation6 + $0x5a8] sm:$0xff]
    %v656 = vld [vmem:[#allocation6 + $0x5b0] sm:$0xff]
    %v657 = vld [vmem:[#allocation6 + $0x5b8] sm:$0xff]
    %v658 = vld [vmem:[#allocation6 + $0x5c0] sm:$0xff]
    %v659 = vld [vmem:[#allocation6 + $0x5c8] sm:$0xff]
    %v660 = vld [vmem:[#allocation6 + $0x5d0] sm:$0xff]
    %v661 = vld [vmem:[#allocation6 + $0x5d8] sm:$0xff]
    %v662 = vld [vmem:[#allocation6 + $0x5e0] sm:$0xff]
    %v663 = vld [vmem:[#allocation6 + $0x5e8] sm:$0xff]
    %v664 = vld [vmem:[#allocation6 + $0x5f0] sm:$0xff]
    %v665 = vld [vmem:[#allocation6 + $0x5f8] sm:$0xff]
    %v666 = vld [vmem:[#allocation6 + $0x600] sm:$0xff]
    %v667 = vld [vmem:[#allocation6 + $0x608] sm:$0xff]
    %v668 = vld [vmem:[#allocation6 + $0x610] sm:$0xff]
    %v669 = vld [vmem:[#allocation6 + $0x618] sm:$0xff]
    %v670 = vld [vmem:[#allocation6 + $0x620] sm:$0xff]
    %v671 = vld [vmem:[#allocation6 + $0x628] sm:$0xff]
    %v672 = vld [vmem:[#allocation6 + $0x630] sm:$0xff]
    %v673 = vld [vmem:[#allocation6 + $0x638] sm:$0xff]
    %v674 = vld [vmem:[#allocation6 + $0x640] sm:$0xff]
    %v675 = vld [vmem:[#allocation6 + $0x648] sm:$0xff]
    %v676 = vld [vmem:[#allocation6 + $0x650] sm:$0xff]
    %v677 = vld [vmem:[#allocation6 + $0x658] sm:$0xff]
    %v678 = vld [vmem:[#allocation6 + $0x660] sm:$0xff]
    %v679 = vld [vmem:[#allocation6 + $0x668] sm:$0xff]
    %v680 = vld [vmem:[#allocation6 + $0x670] sm:$0xff]
    %v681 = vld [vmem:[#allocation6 + $0x678] sm:$0xff]
    %v682 = vld [vmem:[#allocation6 + $0x680] sm:$0xff]
    %v683 = vld [vmem:[#allocation6 + $0x688] sm:$0xff]
    %v684 = vld [vmem:[#allocation6 + $0x690] sm:$0xff]
    %v685 = vld [vmem:[#allocation6 + $0x698] sm:$0xff]
    %v686 = vld [vmem:[#allocation6 + $0x6a0] sm:$0xff]
    %v687 = vld [vmem:[#allocation6 + $0x6a8] sm:$0xff]
    %v688 = vld [vmem:[#allocation6 + $0x6b0] sm:$0xff]
    %v689 = vld [vmem:[#allocation6 + $0x6b8] sm:$0xff]
    %v690 = vld [vmem:[#allocation6 + $0x6c0] sm:$0xff]
    %v691 = vld [vmem:[#allocation6 + $0x6c8] sm:$0xff]
    %v692 = vld [vmem:[#allocation6 + $0x6d0] sm:$0xff]
    %v693 = vld [vmem:[#allocation6 + $0x6d8] sm:$0xff]
    %v694 = vld [vmem:[#allocation6 + $0x6e0] sm:$0xff]
    %v695 = vld [vmem:[#allocation6 + $0x6e8] sm:$0xff]
    %v696 = vld [vmem:[#allocation6 + $0x6f0] sm:$0xff]
    %v697 = vld [vmem:[#allocation6 + $0x6f8] sm:$0xff]
    %v698 = vld [vmem:[#allocation6 + $0x700] sm:$0xff]
    %v699 = vld [vmem:[#allocation6 + $0x708] sm:$0xff]
    %v700 = vld [vmem:[#allocation6 + $0x710] sm:$0xff]
    %v701 = vld [vmem:[#allocation6 + $0x718] sm:$0xff]
    %v702 = vld [vmem:[#allocation6 + $0x720] sm:$0xff]
    %v703 = vld [vmem:[#allocation6 + $0x728] sm:$0xff]
    %v704 = vld [vmem:[#allocation6 + $0x730] sm:$0xff]
    %v705 = vld [vmem:[#allocation6 + $0x738] sm:$0xff]
    %v706 = vld [vmem:[#allocation6 + $0x740] sm:$0xff]
    %v707 = vld [vmem:[#allocation6 + $0x748] sm:$0xff]
    %v708 = vld [vmem:[#allocation6 + $0x750] sm:$0xff]
    %v709 = vld [vmem:[#allocation6 + $0x758] sm:$0xff]
    %v710 = vld [vmem:[#allocation6 + $0x760] sm:$0xff]
    %v711 = vld [vmem:[#allocation6 + $0x768] sm:$0xff]
    %v712 = vld [vmem:[#allocation6 + $0x770] sm:$0xff]
    %v713 = vld [vmem:[#allocation6 + $0x778] sm:$0xff]
    %v714 = vld [vmem:[#allocation6 + $0x780] sm:$0xff]
    %v715 = vld [vmem:[#allocation6 + $0x788] sm:$0xff]
    %v716 = vld [vmem:[#allocation6 + $0x790] sm:$0xff]
    %v717 = vld [vmem:[#allocation6 + $0x798] sm:$0xff]
    %v718 = vld [vmem:[#allocation6 + $0x7a0] sm:$0xff]
    %v719 = vld [vmem:[#allocation6 + $0x7a8] sm:$0xff]
    %v720 = vld [vmem:[#allocation6 + $0x7b0] sm:$0xff]
    %v721 = vld [vmem:[#allocation6 + $0x7b8] sm:$0xff]
    %v722 = vld [vmem:[#allocation6 + $0x7c0] sm:$0xff]
    %v723 = vld [vmem:[#allocation6 + $0x7c8] sm:$0xff]
    %v724 = vld [vmem:[#allocation6 + $0x7d0] sm:$0xff]
    %v725 = vld [vmem:[#allocation6 + $0x7d8] sm:$0xff]
    %v726 = vld [vmem:[#allocation6 + $0x7e0] sm:$0xff]
    %v727 = vld [vmem:[#allocation6 + $0x7e8] sm:$0xff]
    %v728 = vld [vmem:[#allocation6 + $0x7f0] sm:$0xff]
    %v729 = vld [vmem:[#allocation6 + $0x7f8] sm:$0xff]
    %v730 = vld [vmem:[#allocation7] sm:$0xf]
    %v732 = vlaneseq
    %v733 = vshrl.u32 %v732, 7
    %v734 = vsub.s32 0, %v733
    %v735 = vrot.slane %v730, %v734
    %v736 = vlaneseq
    %v737 = vshrl.u32 %v736, 7
    %v738 = vsub.s32 1, %v737
    %v739 = vrot.slane %v730, %v738
    %v740 = vlaneseq
    %v741 = vshrl.u32 %v740, 7
    %v742 = vsub.s32 2, %v741
    %v743 = vrot.slane %v730, %v742
    %v744 = vlaneseq
    %v745 = vshrl.u32 %v744, 7
    %v746 = vsub.s32 3, %v745
    %v747 = vrot.slane %v730, %v746
    %v1008 = vunpack.c.l.b16 %v474
    %v1009 = vunpack.c.h.b16 %v474
    %v1010 = vunpack.c.l.b16 %v475
    %v1011 = vunpack.c.h.b16 %v475
    %v1012 = vunpack.c.l.b16 %v476
    %v1013 = vunpack.c.h.b16 %v476
    %v1014 = vunpack.c.l.b16 %v477
    %v1015 = vunpack.c.h.b16 %v477
    %v1016 = vunpack.c.l.b16 %v478
    %v1017 = vunpack.c.h.b16 %v478
    %v1018 = vunpack.c.l.b16 %v479
    %v1019 = vunpack.c.h.b16 %v479
    %v1020 = vunpack.c.l.b16 %v480
    %v1021 = vunpack.c.h.b16 %v480
    %v1022 = vunpack.c.l.b16 %v481
    %v1023 = vunpack.c.h.b16 %v481
    %v1024 = vunpack.c.l.b16 %v482
    %v1025 = vunpack.c.h.b16 %v482
    %v1026 = vunpack.c.l.b16 %v483
    %v1027 = vunpack.c.h.b16 %v483
    %v1028 = vunpack.c.l.b16 %v484
    %v1029 = vunpack.c.h.b16 %v484
    %v1030 = vunpack.c.l.b16 %v485
    %v1031 = vunpack.c.h.b16 %v485
    %v1032 = vunpack.c.l.b16 %v486
    %v1033 = vunpack.c.h.b16 %v486
    %v1034 = vunpack.c.l.b16 %v487
    %v1035 = vunpack.c.h.b16 %v487
    %v1036 = vunpack.c.l.b16 %v488
    %v1037 = vunpack.c.h.b16 %v488
    %v1038 = vunpack.c.l.b16 %v489
    %v1039 = vunpack.c.h.b16 %v489
    %v1040 = vunpack.c.l.b16 %v490
    %v1041 = vunpack.c.h.b16 %v490
    %v1042 = vunpack.c.l.b16 %v491
    %v1043 = vunpack.c.h.b16 %v491
    %v1044 = vunpack.c.l.b16 %v492
    %v1045 = vunpack.c.h.b16 %v492
    %v1046 = vunpack.c.l.b16 %v493
    %v1047 = vunpack.c.h.b16 %v493
    %v1048 = vunpack.c.l.b16 %v494
    %v1049 = vunpack.c.h.b16 %v494
    %v1050 = vunpack.c.l.b16 %v495
    %v1051 = vunpack.c.h.b16 %v495
    %v1052 = vunpack.c.l.b16 %v496
    %v1053 = vunpack.c.h.b16 %v496
    %v1054 = vunpack.c.l.b16 %v497
    %v1055 = vunpack.c.h.b16 %v497
    %v1056 = vunpack.c.l.b16 %v498
    %v1057 = vunpack.c.h.b16 %v498
    %v1058 = vunpack.c.l.b16 %v499
    %v1059 = vunpack.c.h.b16 %v499
    %v1060 = vunpack.c.l.b16 %v500
    %v1061 = vunpack.c.h.b16 %v500
    %v1062 = vunpack.c.l.b16 %v501
    %v1063 = vunpack.c.h.b16 %v501
    %v1064 = vunpack.c.l.b16 %v502
    %v1065 = vunpack.c.h.b16 %v502
    %v1066 = vunpack.c.l.b16 %v503
    %v1067 = vunpack.c.h.b16 %v503
    %v1068 = vunpack.c.l.b16 %v504
    %v1069 = vunpack.c.h.b16 %v504
    %v1070 = vunpack.c.l.b16 %v505
    %v1071 = vunpack.c.h.b16 %v505
    %v1072 = vunpack.c.l.b16 %v506
    %v1073 = vunpack.c.h.b16 %v506
    %v1074 = vunpack.c.l.b16 %v507
    %v1075 = vunpack.c.h.b16 %v507
    %v1076 = vunpack.c.l.b16 %v508
    %v1077 = vunpack.c.h.b16 %v508
    %v1078 = vunpack.c.l.b16 %v509
    %v1079 = vunpack.c.h.b16 %v509
    %v1080 = vunpack.c.l.b16 %v510
    %v1081 = vunpack.c.h.b16 %v510
    %v1082 = vunpack.c.l.b16 %v511
    %v1083 = vunpack.c.h.b16 %v511
    %v1084 = vunpack.c.l.b16 %v512
    %v1085 = vunpack.c.h.b16 %v512
    %v1086 = vunpack.c.l.b16 %v513
    %v1087 = vunpack.c.h.b16 %v513
    %v1088 = vunpack.c.l.b16 %v514
    %v1089 = vunpack.c.h.b16 %v514
    %v1090 = vunpack.c.l.b16 %v515
    %v1091 = vunpack.c.h.b16 %v515
    %v1092 = vunpack.c.l.b16 %v516
    %v1093 = vunpack.c.h.b16 %v516
    %v1094 = vunpack.c.l.b16 %v517
    %v1095 = vunpack.c.h.b16 %v517
    %v1096 = vunpack.c.l.b16 %v518
    %v1097 = vunpack.c.h.b16 %v518
    %v1098 = vunpack.c.l.b16 %v519
    %v1099 = vunpack.c.h.b16 %v519
    %v1100 = vunpack.c.l.b16 %v520
    %v1101 = vunpack.c.h.b16 %v520
    %v1102 = vunpack.c.l.b16 %v521
    %v1103 = vunpack.c.h.b16 %v521
    %v1104 = vunpack.c.l.b16 %v522
    %v1105 = vunpack.c.h.b16 %v522
    %v1106 = vunpack.c.l.b16 %v523
    %v1107 = vunpack.c.h.b16 %v523
    %v1108 = vunpack.c.l.b16 %v524
    %v1109 = vunpack.c.h.b16 %v524
    %v1110 = vunpack.c.l.b16 %v525
    %v1111 = vunpack.c.h.b16 %v525
    %v1112 = vunpack.c.l.b16 %v526
    %v1113 = vunpack.c.h.b16 %v526
    %v1114 = vunpack.c.l.b16 %v527
    %v1115 = vunpack.c.h.b16 %v527
    %v1116 = vunpack.c.l.b16 %v528
    %v1117 = vunpack.c.h.b16 %v528
    %v1118 = vunpack.c.l.b16 %v529
    %v1119 = vunpack.c.h.b16 %v529
    %v1120 = vunpack.c.l.b16 %v530
    %v1121 = vunpack.c.h.b16 %v530
    %v1122 = vunpack.c.l.b16 %v531
    %v1123 = vunpack.c.h.b16 %v531
    %v1124 = vunpack.c.l.b16 %v532
    %v1125 = vunpack.c.h.b16 %v532
    %v1126 = vunpack.c.l.b16 %v533
    %v1127 = vunpack.c.h.b16 %v533
    %v1128 = vunpack.c.l.b16 %v534
    %v1129 = vunpack.c.h.b16 %v534
    %v1130 = vunpack.c.l.b16 %v535
    %v1131 = vunpack.c.h.b16 %v535
    %v1132 = vunpack.c.l.b16 %v536
    %v1133 = vunpack.c.h.b16 %v536
    %v1134 = vunpack.c.l.b16 %v537
    %v1135 = vunpack.c.h.b16 %v537
    %v1136 = vunpack.c.l.b16 %v538
    %v1137 = vunpack.c.h.b16 %v538
    %v1138 = vunpack.c.l.b16 %v539
    %v1139 = vunpack.c.h.b16 %v539
    %v1140 = vunpack.c.l.b16 %v540
    %v1141 = vunpack.c.h.b16 %v540
    %v1142 = vunpack.c.l.b16 %v541
    %v1143 = vunpack.c.h.b16 %v541
    %v1144 = vunpack.c.l.b16 %v542
    %v1145 = vunpack.c.h.b16 %v542
    %v1146 = vunpack.c.l.b16 %v543
    %v1147 = vunpack.c.h.b16 %v543
    %v1148 = vunpack.c.l.b16 %v544
    %v1149 = vunpack.c.h.b16 %v544
    %v1150 = vunpack.c.l.b16 %v545
    %v1151 = vunpack.c.h.b16 %v545
    %v1152 = vunpack.c.l.b16 %v546
    %v1153 = vunpack.c.h.b16 %v546
    %v1154 = vunpack.c.l.b16 %v547
    %v1155 = vunpack.c.h.b16 %v547
    %v1156 = vunpack.c.l.b16 %v548
    %v1157 = vunpack.c.h.b16 %v548
    %v1158 = vunpack.c.l.b16 %v549
    %v1159 = vunpack.c.h.b16 %v549
    %v1160 = vunpack.c.l.b16 %v550
    %v1161 = vunpack.c.h.b16 %v550
    %v1162 = vunpack.c.l.b16 %v551
    %v1163 = vunpack.c.h.b16 %v551
    %v1164 = vunpack.c.l.b16 %v552
    %v1165 = vunpack.c.h.b16 %v552
    %v1166 = vunpack.c.l.b16 %v553
    %v1167 = vunpack.c.h.b16 %v553
    %v1168 = vunpack.c.l.b16 %v554
    %v1169 = vunpack.c.h.b16 %v554
    %v1170 = vunpack.c.l.b16 %v555
    %v1171 = vunpack.c.h.b16 %v555
    %v1172 = vunpack.c.l.b16 %v556
    %v1173 = vunpack.c.h.b16 %v556
    %v1174 = vunpack.c.l.b16 %v557
    %v1175 = vunpack.c.h.b16 %v557
    %v1176 = vunpack.c.l.b16 %v558
    %v1177 = vunpack.c.h.b16 %v558
    %v1178 = vunpack.c.l.b16 %v559
    %v1179 = vunpack.c.h.b16 %v559
    %v1180 = vunpack.c.l.b16 %v560
    %v1181 = vunpack.c.h.b16 %v560
    %v1182 = vunpack.c.l.b16 %v561
    %v1183 = vunpack.c.h.b16 %v561
    %v1184 = vunpack.c.l.b16 %v562
    %v1185 = vunpack.c.h.b16 %v562
    %v1186 = vunpack.c.l.b16 %v563
    %v1187 = vunpack.c.h.b16 %v563
    %v1188 = vunpack.c.l.b16 %v564
    %v1189 = vunpack.c.h.b16 %v564
    %v1190 = vunpack.c.l.b16 %v565
    %v1191 = vunpack.c.h.b16 %v565
    %v1192 = vunpack.c.l.b16 %v566
    %v1193 = vunpack.c.h.b16 %v566
    %v1194 = vunpack.c.l.b16 %v567
    %v1195 = vunpack.c.h.b16 %v567
    %v1196 = vunpack.c.l.b16 %v568
    %v1197 = vunpack.c.h.b16 %v568
    %v1198 = vunpack.c.l.b16 %v569
    %v1199 = vunpack.c.h.b16 %v569
    %v1200 = vunpack.c.l.b16 %v570
    %v1201 = vunpack.c.h.b16 %v570
    %v1202 = vunpack.c.l.b16 %v571
    %v1203 = vunpack.c.h.b16 %v571
    %v1204 = vunpack.c.l.b16 %v572
    %v1205 = vunpack.c.h.b16 %v572
    %v1206 = vunpack.c.l.b16 %v573
    %v1207 = vunpack.c.h.b16 %v573
    %v1208 = vunpack.c.l.b16 %v574
    %v1209 = vunpack.c.h.b16 %v574
    %v1210 = vunpack.c.l.b16 %v575
    %v1211 = vunpack.c.h.b16 %v575
    %v1212 = vunpack.c.l.b16 %v576
    %v1213 = vunpack.c.h.b16 %v576
    %v1214 = vunpack.c.l.b16 %v577
    %v1215 = vunpack.c.h.b16 %v577
    %v1216 = vunpack.c.l.b16 %v578
    %v1217 = vunpack.c.h.b16 %v578
    %v1218 = vunpack.c.l.b16 %v579
    %v1219 = vunpack.c.h.b16 %v579
    %v1220 = vunpack.c.l.b16 %v580
    %v1221 = vunpack.c.h.b16 %v580
    %v1222 = vunpack.c.l.b16 %v581
    %v1223 = vunpack.c.h.b16 %v581
    %v1224 = vunpack.c.l.b16 %v582
    %v1225 = vunpack.c.h.b16 %v582
    %v1226 = vunpack.c.l.b16 %v583
    %v1227 = vunpack.c.h.b16 %v583
    %v1228 = vunpack.c.l.b16 %v584
    %v1229 = vunpack.c.h.b16 %v584
    %v1230 = vunpack.c.l.b16 %v585
    %v1231 = vunpack.c.h.b16 %v585
    %v1232 = vunpack.c.l.b16 %v586
    %v1233 = vunpack.c.h.b16 %v586
    %v1234 = vunpack.c.l.b16 %v587
    %v1235 = vunpack.c.h.b16 %v587
    %v1236 = vunpack.c.l.b16 %v588
    %v1237 = vunpack.c.h.b16 %v588
    %v1238 = vunpack.c.l.b16 %v589
    %v1239 = vunpack.c.h.b16 %v589
    %v1240 = vunpack.c.l.b16 %v590
    %v1241 = vunpack.c.h.b16 %v590
    %v1242 = vunpack.c.l.b16 %v591
    %v1243 = vunpack.c.h.b16 %v591
    %v1244 = vunpack.c.l.b16 %v592
    %v1245 = vunpack.c.h.b16 %v592
    %v1246 = vunpack.c.l.b16 %v593
    %v1247 = vunpack.c.h.b16 %v593
    %v1248 = vunpack.c.l.b16 %v594
    %v1249 = vunpack.c.h.b16 %v594
    %v1250 = vunpack.c.l.b16 %v595
    %v1251 = vunpack.c.h.b16 %v595
    %v1252 = vunpack.c.l.b16 %v596
    %v1253 = vunpack.c.h.b16 %v596
    %v1254 = vunpack.c.l.b16 %v597
    %v1255 = vunpack.c.h.b16 %v597
    %v1256 = vunpack.c.l.b16 %v598
    %v1257 = vunpack.c.h.b16 %v598
    %v1258 = vunpack.c.l.b16 %v599
    %v1259 = vunpack.c.h.b16 %v599
    %v1260 = vunpack.c.l.b16 %v600
    %v1261 = vunpack.c.h.b16 %v600
    %v1262 = vunpack.c.l.b16 %v601
    %v1263 = vunpack.c.h.b16 %v601
    %v1264 = vunpack.c.l.b16 %v602
    %v1265 = vunpack.c.h.b16 %v602
    %v1266 = vunpack.c.l.b16 %v603
    %v1267 = vunpack.c.h.b16 %v603
    %v1268 = vunpack.c.l.b16 %v604
    %v1269 = vunpack.c.h.b16 %v604
    %v1270 = vunpack.c.l.b16 %v605
    %v1271 = vunpack.c.h.b16 %v605
    %v1272 = vunpack.c.l.b16 %v606
    %v1273 = vunpack.c.h.b16 %v606
    %v1274 = vunpack.c.l.b16 %v607
    %v1275 = vunpack.c.h.b16 %v607
    %v1276 = vunpack.c.l.b16 %v608
    %v1277 = vunpack.c.h.b16 %v608
    %v1278 = vunpack.c.l.b16 %v609
    %v1279 = vunpack.c.h.b16 %v609
    %v1280 = vunpack.c.l.b16 %v610
    %v1281 = vunpack.c.h.b16 %v610
    %v1282 = vunpack.c.l.b16 %v611
    %v1283 = vunpack.c.h.b16 %v611
    %v1284 = vunpack.c.l.b16 %v612
    %v1285 = vunpack.c.h.b16 %v612
    %v1286 = vunpack.c.l.b16 %v613
    %v1287 = vunpack.c.h.b16 %v613
    %v1288 = vunpack.c.l.b16 %v614
    %v1289 = vunpack.c.h.b16 %v614
    %v1290 = vunpack.c.l.b16 %v615
    %v1291 = vunpack.c.h.b16 %v615
    %v1292 = vunpack.c.l.b16 %v616
    %v1293 = vunpack.c.h.b16 %v616
    %v1294 = vunpack.c.l.b16 %v617
    %v1295 = vunpack.c.h.b16 %v617
    %v1296 = vunpack.c.l.b16 %v618
    %v1297 = vunpack.c.h.b16 %v618
    %v1298 = vunpack.c.l.b16 %v619
    %v1299 = vunpack.c.h.b16 %v619
    %v1300 = vunpack.c.l.b16 %v620
    %v1301 = vunpack.c.h.b16 %v620
    %v1302 = vunpack.c.l.b16 %v621
    %v1303 = vunpack.c.h.b16 %v621
    %v1304 = vunpack.c.l.b16 %v622
    %v1305 = vunpack.c.h.b16 %v622
    %v1306 = vunpack.c.l.b16 %v623
    %v1307 = vunpack.c.h.b16 %v623
    %v1308 = vunpack.c.l.b16 %v624
    %v1309 = vunpack.c.h.b16 %v624
    %v1310 = vunpack.c.l.b16 %v625
    %v1311 = vunpack.c.h.b16 %v625
    %v1312 = vunpack.c.l.b16 %v626
    %v1313 = vunpack.c.h.b16 %v626
    %v1314 = vunpack.c.l.b16 %v627
    %v1315 = vunpack.c.h.b16 %v627
    %v1316 = vunpack.c.l.b16 %v628
    %v1317 = vunpack.c.h.b16 %v628
    %v1318 = vunpack.c.l.b16 %v629
    %v1319 = vunpack.c.h.b16 %v629
    %v1320 = vunpack.c.l.b16 %v630
    %v1321 = vunpack.c.h.b16 %v630
    %v1322 = vunpack.c.l.b16 %v631
    %v1323 = vunpack.c.h.b16 %v631
    %v1324 = vunpack.c.l.b16 %v632
    %v1325 = vunpack.c.h.b16 %v632
    %v1326 = vunpack.c.l.b16 %v633
    %v1327 = vunpack.c.h.b16 %v633
    %v1328 = vunpack.c.l.b16 %v634
    %v1329 = vunpack.c.h.b16 %v634
    %v1330 = vunpack.c.l.b16 %v635
    %v1331 = vunpack.c.h.b16 %v635
    %v1332 = vunpack.c.l.b16 %v636
    %v1333 = vunpack.c.h.b16 %v636
    %v1334 = vunpack.c.l.b16 %v637
    %v1335 = vunpack.c.h.b16 %v637
    %v1336 = vunpack.c.l.b16 %v638
    %v1337 = vunpack.c.h.b16 %v638
    %v1338 = vunpack.c.l.b16 %v639
    %v1339 = vunpack.c.h.b16 %v639
    %v1340 = vunpack.c.l.b16 %v640
    %v1341 = vunpack.c.h.b16 %v640
    %v1342 = vunpack.c.l.b16 %v641
    %v1343 = vunpack.c.h.b16 %v641
    %v1344 = vunpack.c.l.b16 %v642
    %v1345 = vunpack.c.h.b16 %v642
    %v1346 = vunpack.c.l.b16 %v643
    %v1347 = vunpack.c.h.b16 %v643
    %v1348 = vunpack.c.l.b16 %v644
    %v1349 = vunpack.c.h.b16 %v644
    %v1350 = vunpack.c.l.b16 %v645
    %v1351 = vunpack.c.h.b16 %v645
    %v1352 = vunpack.c.l.b16 %v646
    %v1353 = vunpack.c.h.b16 %v646
    %v1354 = vunpack.c.l.b16 %v647
    %v1355 = vunpack.c.h.b16 %v647
    %v1356 = vunpack.c.l.b16 %v648
    %v1357 = vunpack.c.h.b16 %v648
    %v1358 = vunpack.c.l.b16 %v649
    %v1359 = vunpack.c.h.b16 %v649
    %v1360 = vunpack.c.l.b16 %v650
    %v1361 = vunpack.c.h.b16 %v650
    %v1362 = vunpack.c.l.b16 %v651
    %v1363 = vunpack.c.h.b16 %v651
    %v1364 = vunpack.c.l.b16 %v652
    %v1365 = vunpack.c.h.b16 %v652
    %v1366 = vunpack.c.l.b16 %v653
    %v1367 = vunpack.c.h.b16 %v653
    %v1368 = vunpack.c.l.b16 %v654
    %v1369 = vunpack.c.h.b16 %v654
    %v1370 = vunpack.c.l.b16 %v655
    %v1371 = vunpack.c.h.b16 %v655
    %v1372 = vunpack.c.l.b16 %v656
    %v1373 = vunpack.c.h.b16 %v656
    %v1374 = vunpack.c.l.b16 %v657
    %v1375 = vunpack.c.h.b16 %v657
    %v1376 = vunpack.c.l.b16 %v658
    %v1377 = vunpack.c.h.b16 %v658
    %v1378 = vunpack.c.l.b16 %v659
    %v1379 = vunpack.c.h.b16 %v659
    %v1380 = vunpack.c.l.b16 %v660
    %v1381 = vunpack.c.h.b16 %v660
    %v1382 = vunpack.c.l.b16 %v661
    %v1383 = vunpack.c.h.b16 %v661
    %v1384 = vunpack.c.l.b16 %v662
    %v1385 = vunpack.c.h.b16 %v662
    %v1386 = vunpack.c.l.b16 %v663
    %v1387 = vunpack.c.h.b16 %v663
    %v1388 = vunpack.c.l.b16 %v664
    %v1389 = vunpack.c.h.b16 %v664
    %v1390 = vunpack.c.l.b16 %v665
    %v1391 = vunpack.c.h.b16 %v665
    %v1392 = vunpack.c.l.b16 %v666
    %v1393 = vunpack.c.h.b16 %v666
    %v1394 = vunpack.c.l.b16 %v667
    %v1395 = vunpack.c.h.b16 %v667
    %v1396 = vunpack.c.l.b16 %v668
    %v1397 = vunpack.c.h.b16 %v668
    %v1398 = vunpack.c.l.b16 %v669
    %v1399 = vunpack.c.h.b16 %v669
    %v1400 = vunpack.c.l.b16 %v670
    %v1401 = vunpack.c.h.b16 %v670
    %v1402 = vunpack.c.l.b16 %v671
    %v1403 = vunpack.c.h.b16 %v671
    %v1404 = vunpack.c.l.b16 %v672
    %v1405 = vunpack.c.h.b16 %v672
    %v1406 = vunpack.c.l.b16 %v673
    %v1407 = vunpack.c.h.b16 %v673
    %v1408 = vunpack.c.l.b16 %v674
    %v1409 = vunpack.c.h.b16 %v674
    %v1410 = vunpack.c.l.b16 %v675
    %v1411 = vunpack.c.h.b16 %v675
    %v1412 = vunpack.c.l.b16 %v676
    %v1413 = vunpack.c.h.b16 %v676
    %v1414 = vunpack.c.l.b16 %v677
    %v1415 = vunpack.c.h.b16 %v677
    %v1416 = vunpack.c.l.b16 %v678
    %v1417 = vunpack.c.h.b16 %v678
    %v1418 = vunpack.c.l.b16 %v679
    %v1419 = vunpack.c.h.b16 %v679
    %v1420 = vunpack.c.l.b16 %v680
    %v1421 = vunpack.c.h.b16 %v680
    %v1422 = vunpack.c.l.b16 %v681
    %v1423 = vunpack.c.h.b16 %v681
    %v1424 = vunpack.c.l.b16 %v682
    %v1425 = vunpack.c.h.b16 %v682
    %v1426 = vunpack.c.l.b16 %v683
    %v1427 = vunpack.c.h.b16 %v683
    %v1428 = vunpack.c.l.b16 %v684
    %v1429 = vunpack.c.h.b16 %v684
    %v1430 = vunpack.c.l.b16 %v685
    %v1431 = vunpack.c.h.b16 %v685
    %v1432 = vunpack.c.l.b16 %v686
    %v1433 = vunpack.c.h.b16 %v686
    %v1434 = vunpack.c.l.b16 %v687
    %v1435 = vunpack.c.h.b16 %v687
    %v1436 = vunpack.c.l.b16 %v688
    %v1437 = vunpack.c.h.b16 %v688
    %v1438 = vunpack.c.l.b16 %v689
    %v1439 = vunpack.c.h.b16 %v689
    %v1440 = vunpack.c.l.b16 %v690
    %v1441 = vunpack.c.h.b16 %v690
    %v1442 = vunpack.c.l.b16 %v691
    %v1443 = vunpack.c.h.b16 %v691
    %v1444 = vunpack.c.l.b16 %v692
    %v1445 = vunpack.c.h.b16 %v692
    %v1446 = vunpack.c.l.b16 %v693
    %v1447 = vunpack.c.h.b16 %v693
    %v1448 = vunpack.c.l.b16 %v694
    %v1449 = vunpack.c.h.b16 %v694
    %v1450 = vunpack.c.l.b16 %v695
    %v1451 = vunpack.c.h.b16 %v695
    %v1452 = vunpack.c.l.b16 %v696
    %v1453 = vunpack.c.h.b16 %v696
    %v1454 = vunpack.c.l.b16 %v697
    %v1455 = vunpack.c.h.b16 %v697
    %v1456 = vunpack.c.l.b16 %v698
    %v1457 = vunpack.c.h.b16 %v698
    %v1458 = vunpack.c.l.b16 %v699
    %v1459 = vunpack.c.h.b16 %v699
    %v1460 = vunpack.c.l.b16 %v700
    %v1461 = vunpack.c.h.b16 %v700
    %v1462 = vunpack.c.l.b16 %v701
    %v1463 = vunpack.c.h.b16 %v701
    %v1464 = vunpack.c.l.b16 %v702
    %v1465 = vunpack.c.h.b16 %v702
    %v1466 = vunpack.c.l.b16 %v703
    %v1467 = vunpack.c.h.b16 %v703
    %v1468 = vunpack.c.l.b16 %v704
    %v1469 = vunpack.c.h.b16 %v704
    %v1470 = vunpack.c.l.b16 %v705
    %v1471 = vunpack.c.h.b16 %v705
    %v1472 = vunpack.c.l.b16 %v706
    %v1473 = vunpack.c.h.b16 %v706
    %v1474 = vunpack.c.l.b16 %v707
    %v1475 = vunpack.c.h.b16 %v707
    %v1476 = vunpack.c.l.b16 %v708
    %v1477 = vunpack.c.h.b16 %v708
    %v1478 = vunpack.c.l.b16 %v709
    %v1479 = vunpack.c.h.b16 %v709
    %v1480 = vunpack.c.l.b16 %v710
    %v1481 = vunpack.c.h.b16 %v710
    %v1482 = vunpack.c.l.b16 %v711
    %v1483 = vunpack.c.h.b16 %v711
    %v1484 = vunpack.c.l.b16 %v712
    %v1485 = vunpack.c.h.b16 %v712
    %v1486 = vunpack.c.l.b16 %v713
    %v1487 = vunpack.c.h.b16 %v713
    %v1488 = vunpack.c.l.b16 %v714
    %v1489 = vunpack.c.h.b16 %v714
    %v1490 = vunpack.c.l.b16 %v715
    %v1491 = vunpack.c.h.b16 %v715
    %v1492 = vunpack.c.l.b16 %v716
    %v1493 = vunpack.c.h.b16 %v716
    %v1494 = vunpack.c.l.b16 %v717
    %v1495 = vunpack.c.h.b16 %v717
    %v1496 = vunpack.c.l.b16 %v718
    %v1497 = vunpack.c.h.b16 %v718
    %v1498 = vunpack.c.l.b16 %v719
    %v1499 = vunpack.c.h.b16 %v719
    %v1500 = vunpack.c.l.b16 %v720
    %v1501 = vunpack.c.h.b16 %v720
    %v1502 = vunpack.c.l.b16 %v721
    %v1503 = vunpack.c.h.b16 %v721
    %v1504 = vunpack.c.l.b16 %v722
    %v1505 = vunpack.c.h.b16 %v722
    %v1506 = vunpack.c.l.b16 %v723
    %v1507 = vunpack.c.h.b16 %v723
    %v1508 = vunpack.c.l.b16 %v724
    %v1509 = vunpack.c.h.b16 %v724
    %v1510 = vunpack.c.l.b16 %v725
    %v1511 = vunpack.c.h.b16 %v725
    %v1512 = vunpack.c.l.b16 %v726
    %v1513 = vunpack.c.h.b16 %v726
    %v1514 = vunpack.c.l.b16 %v727
    %v1515 = vunpack.c.h.b16 %v727
    %v1516 = vunpack.c.l.b16 %v728
    %v1517 = vunpack.c.h.b16 %v728
    %v1518 = vunpack.c.l.b16 %v729
    %v1519 = vunpack.c.h.b16 %v729
    %v1520 = vpack.c.b16 %v1012, %v1008
    %v1521 = vpack.c.b16 %v1013, %v1009
    %v1522 = vpack.c.b16 %v1014, %v1010
    %v1523 = vpack.c.b16 %v1015, %v1011
    %v1524 = vpack.c.b16 %v1020, %v1016
    %v1525 = vpack.c.b16 %v1021, %v1017
    %v1526 = vpack.c.b16 %v1022, %v1018
    %v1527 = vpack.c.b16 %v1023, %v1019
    %v1528 = vpack.c.b16 %v1028, %v1024
    %v1529 = vpack.c.b16 %v1029, %v1025
    %v1530 = vpack.c.b16 %v1030, %v1026
    %v1531 = vpack.c.b16 %v1031, %v1027
    %v1532 = vpack.c.b16 %v1036, %v1032
    %v1533 = vpack.c.b16 %v1037, %v1033
    %v1534 = vpack.c.b16 %v1038, %v1034
    %v1535 = vpack.c.b16 %v1039, %v1035
    %v1536 = vpack.c.b16 %v1044, %v1040
    %v1537 = vpack.c.b16 %v1045, %v1041
    %v1538 = vpack.c.b16 %v1046, %v1042
    %v1539 = vpack.c.b16 %v1047, %v1043
    %v1540 = vpack.c.b16 %v1052, %v1048
    %v1541 = vpack.c.b16 %v1053, %v1049
    %v1542 = vpack.c.b16 %v1054, %v1050
    %v1543 = vpack.c.b16 %v1055, %v1051
    %v1544 = vpack.c.b16 %v1060, %v1056
    %v1545 = vpack.c.b16 %v1061, %v1057
    %v1546 = vpack.c.b16 %v1062, %v1058
    %v1547 = vpack.c.b16 %v1063, %v1059
    %v1548 = vpack.c.b16 %v1068, %v1064
    %v1549 = vpack.c.b16 %v1069, %v1065
    %v1550 = vpack.c.b16 %v1070, %v1066
    %v1551 = vpack.c.b16 %v1071, %v1067
    %v1552 = vpack.c.b16 %v1076, %v1072
    %v1553 = vpack.c.b16 %v1077, %v1073
    %v1554 = vpack.c.b16 %v1078, %v1074
    %v1555 = vpack.c.b16 %v1079, %v1075
    %v1556 = vpack.c.b16 %v1084, %v1080
    %v1557 = vpack.c.b16 %v1085, %v1081
    %v1558 = vpack.c.b16 %v1086, %v1082
    %v1559 = vpack.c.b16 %v1087, %v1083
    %v1560 = vpack.c.b16 %v1092, %v1088
    %v1561 = vpack.c.b16 %v1093, %v1089
    %v1562 = vpack.c.b16 %v1094, %v1090
    %v1563 = vpack.c.b16 %v1095, %v1091
    %v1564 = vpack.c.b16 %v1100, %v1096
    %v1565 = vpack.c.b16 %v1101, %v1097
    %v1566 = vpack.c.b16 %v1102, %v1098
    %v1567 = vpack.c.b16 %v1103, %v1099
    %v1568 = vpack.c.b16 %v1108, %v1104
    %v1569 = vpack.c.b16 %v1109, %v1105
    %v1570 = vpack.c.b16 %v1110, %v1106
    %v1571 = vpack.c.b16 %v1111, %v1107
    %v1572 = vpack.c.b16 %v1116, %v1112
    %v1573 = vpack.c.b16 %v1117, %v1113
    %v1574 = vpack.c.b16 %v1118, %v1114
    %v1575 = vpack.c.b16 %v1119, %v1115
    %v1576 = vpack.c.b16 %v1124, %v1120
    %v1577 = vpack.c.b16 %v1125, %v1121
    %v1578 = vpack.c.b16 %v1126, %v1122
    %v1579 = vpack.c.b16 %v1127, %v1123
    %v1580 = vpack.c.b16 %v1132, %v1128
    %v1581 = vpack.c.b16 %v1133, %v1129
    %v1582 = vpack.c.b16 %v1134, %v1130
    %v1583 = vpack.c.b16 %v1135, %v1131
    %v1584 = vpack.c.b16 %v1140, %v1136
    %v1585 = vpack.c.b16 %v1141, %v1137
    %v1586 = vpack.c.b16 %v1142, %v1138
    %v1587 = vpack.c.b16 %v1143, %v1139
    %v1588 = vpack.c.b16 %v1148, %v1144
    %v1589 = vpack.c.b16 %v1149, %v1145
    %v1590 = vpack.c.b16 %v1150, %v1146
    %v1591 = vpack.c.b16 %v1151, %v1147
    %v1592 = vpack.c.b16 %v1156, %v1152
    %v1593 = vpack.c.b16 %v1157, %v1153
    %v1594 = vpack.c.b16 %v1158, %v1154
    %v1595 = vpack.c.b16 %v1159, %v1155
    %v1596 = vpack.c.b16 %v1164, %v1160
    %v1597 = vpack.c.b16 %v1165, %v1161
    %v1598 = vpack.c.b16 %v1166, %v1162
    %v1599 = vpack.c.b16 %v1167, %v1163
    %v1600 = vpack.c.b16 %v1172, %v1168
    %v1601 = vpack.c.b16 %v1173, %v1169
    %v1602 = vpack.c.b16 %v1174, %v1170
    %v1603 = vpack.c.b16 %v1175, %v1171
    %v1604 = vpack.c.b16 %v1180, %v1176
    %v1605 = vpack.c.b16 %v1181, %v1177
    %v1606 = vpack.c.b16 %v1182, %v1178
    %v1607 = vpack.c.b16 %v1183, %v1179
    %v1608 = vpack.c.b16 %v1188, %v1184
    %v1609 = vpack.c.b16 %v1189, %v1185
    %v1610 = vpack.c.b16 %v1190, %v1186
    %v1611 = vpack.c.b16 %v1191, %v1187
    %v1612 = vpack.c.b16 %v1196, %v1192
    %v1613 = vpack.c.b16 %v1197, %v1193
    %v1614 = vpack.c.b16 %v1198, %v1194
    %v1615 = vpack.c.b16 %v1199, %v1195
    %v1616 = vpack.c.b16 %v1204, %v1200
    %v1617 = vpack.c.b16 %v1205, %v1201
    %v1618 = vpack.c.b16 %v1206, %v1202
    %v1619 = vpack.c.b16 %v1207, %v1203
    %v1620 = vpack.c.b16 %v1212, %v1208
    %v1621 = vpack.c.b16 %v1213, %v1209
    %v1622 = vpack.c.b16 %v1214, %v1210
    %v1623 = vpack.c.b16 %v1215, %v1211
    %v1624 = vpack.c.b16 %v1220, %v1216
    %v1625 = vpack.c.b16 %v1221, %v1217
    %v1626 = vpack.c.b16 %v1222, %v1218
    %v1627 = vpack.c.b16 %v1223, %v1219
    %v1628 = vpack.c.b16 %v1228, %v1224
    %v1629 = vpack.c.b16 %v1229, %v1225
    %v1630 = vpack.c.b16 %v1230, %v1226
    %v1631 = vpack.c.b16 %v1231, %v1227
    %v1632 = vpack.c.b16 %v1236, %v1232
    %v1633 = vpack.c.b16 %v1237, %v1233
    %v1634 = vpack.c.b16 %v1238, %v1234
    %v1635 = vpack.c.b16 %v1239, %v1235
    %v1636 = vpack.c.b16 %v1244, %v1240
    %v1637 = vpack.c.b16 %v1245, %v1241
    %v1638 = vpack.c.b16 %v1246, %v1242
    %v1639 = vpack.c.b16 %v1247, %v1243
    %v1640 = vpack.c.b16 %v1252, %v1248
    %v1641 = vpack.c.b16 %v1253, %v1249
    %v1642 = vpack.c.b16 %v1254, %v1250
    %v1643 = vpack.c.b16 %v1255, %v1251
    %v1644 = vpack.c.b16 %v1260, %v1256
    %v1645 = vpack.c.b16 %v1261, %v1257
    %v1646 = vpack.c.b16 %v1262, %v1258
    %v1647 = vpack.c.b16 %v1263, %v1259
    %v1648 = vpack.c.b16 %v1268, %v1264
    %v1649 = vpack.c.b16 %v1269, %v1265
    %v1650 = vpack.c.b16 %v1270, %v1266
    %v1651 = vpack.c.b16 %v1271, %v1267
    %v1652 = vpack.c.b16 %v1276, %v1272
    %v1653 = vpack.c.b16 %v1277, %v1273
    %v1654 = vpack.c.b16 %v1278, %v1274
    %v1655 = vpack.c.b16 %v1279, %v1275
    %v1656 = vpack.c.b16 %v1284, %v1280
    %v1657 = vpack.c.b16 %v1285, %v1281
    %v1658 = vpack.c.b16 %v1286, %v1282
    %v1659 = vpack.c.b16 %v1287, %v1283
    %v1660 = vpack.c.b16 %v1292, %v1288
    %v1661 = vpack.c.b16 %v1293, %v1289
    %v1662 = vpack.c.b16 %v1294, %v1290
    %v1663 = vpack.c.b16 %v1295, %v1291
    %v1664 = vpack.c.b16 %v1300, %v1296
    %v1665 = vpack.c.b16 %v1301, %v1297
    %v1666 = vpack.c.b16 %v1302, %v1298
    %v1667 = vpack.c.b16 %v1303, %v1299
    %v1668 = vpack.c.b16 %v1308, %v1304
    %v1669 = vpack.c.b16 %v1309, %v1305
    %v1670 = vpack.c.b16 %v1310, %v1306
    %v1671 = vpack.c.b16 %v1311, %v1307
    %v1672 = vpack.c.b16 %v1316, %v1312
    %v1673 = vpack.c.b16 %v1317, %v1313
    %v1674 = vpack.c.b16 %v1318, %v1314
    %v1675 = vpack.c.b16 %v1319, %v1315
    %v1676 = vpack.c.b16 %v1324, %v1320
    %v1677 = vpack.c.b16 %v1325, %v1321
    %v1678 = vpack.c.b16 %v1326, %v1322
    %v1679 = vpack.c.b16 %v1327, %v1323
    %v1680 = vpack.c.b16 %v1332, %v1328
    %v1681 = vpack.c.b16 %v1333, %v1329
    %v1682 = vpack.c.b16 %v1334, %v1330
    %v1683 = vpack.c.b16 %v1335, %v1331
    %v1684 = vpack.c.b16 %v1340, %v1336
    %v1685 = vpack.c.b16 %v1341, %v1337
    %v1686 = vpack.c.b16 %v1342, %v1338
    %v1687 = vpack.c.b16 %v1343, %v1339
    %v1688 = vpack.c.b16 %v1348, %v1344
    %v1689 = vpack.c.b16 %v1349, %v1345
    %v1690 = vpack.c.b16 %v1350, %v1346
    %v1691 = vpack.c.b16 %v1351, %v1347
    %v1692 = vpack.c.b16 %v1356, %v1352
    %v1693 = vpack.c.b16 %v1357, %v1353
    %v1694 = vpack.c.b16 %v1358, %v1354
    %v1695 = vpack.c.b16 %v1359, %v1355
    %v1696 = vpack.c.b16 %v1364, %v1360
    %v1697 = vpack.c.b16 %v1365, %v1361
    %v1698 = vpack.c.b16 %v1366, %v1362
    %v1699 = vpack.c.b16 %v1367, %v1363
    %v1700 = vpack.c.b16 %v1372, %v1368
    %v1701 = vpack.c.b16 %v1373, %v1369
    %v1702 = vpack.c.b16 %v1374, %v1370
    %v1703 = vpack.c.b16 %v1375, %v1371
    %v1704 = vpack.c.b16 %v1380, %v1376
    %v1705 = vpack.c.b16 %v1381, %v1377
    %v1706 = vpack.c.b16 %v1382, %v1378
    %v1707 = vpack.c.b16 %v1383, %v1379
    %v1708 = vpack.c.b16 %v1388, %v1384
    %v1709 = vpack.c.b16 %v1389, %v1385
    %v1710 = vpack.c.b16 %v1390, %v1386
    %v1711 = vpack.c.b16 %v1391, %v1387
    %v1712 = vpack.c.b16 %v1396, %v1392
    %v1713 = vpack.c.b16 %v1397, %v1393
    %v1714 = vpack.c.b16 %v1398, %v1394
    %v1715 = vpack.c.b16 %v1399, %v1395
    %v1716 = vpack.c.b16 %v1404, %v1400
    %v1717 = vpack.c.b16 %v1405, %v1401
    %v1718 = vpack.c.b16 %v1406, %v1402
    %v1719 = vpack.c.b16 %v1407, %v1403
    %v1720 = vpack.c.b16 %v1412, %v1408
    %v1721 = vpack.c.b16 %v1413, %v1409
    %v1722 = vpack.c.b16 %v1414, %v1410
    %v1723 = vpack.c.b16 %v1415, %v1411
    %v1724 = vpack.c.b16 %v1420, %v1416
    %v1725 = vpack.c.b16 %v1421, %v1417
    %v1726 = vpack.c.b16 %v1422, %v1418
    %v1727 = vpack.c.b16 %v1423, %v1419
    %v1728 = vpack.c.b16 %v1428, %v1424
    %v1729 = vpack.c.b16 %v1429, %v1425
    %v1730 = vpack.c.b16 %v1430, %v1426
    %v1731 = vpack.c.b16 %v1431, %v1427
    %v1732 = vpack.c.b16 %v1436, %v1432
    %v1733 = vpack.c.b16 %v1437, %v1433
    %v1734 = vpack.c.b16 %v1438, %v1434
    %v1735 = vpack.c.b16 %v1439, %v1435
    %v1736 = vpack.c.b16 %v1444, %v1440
    %v1737 = vpack.c.b16 %v1445, %v1441
    %v1738 = vpack.c.b16 %v1446, %v1442
    %v1739 = vpack.c.b16 %v1447, %v1443
    %v1740 = vpack.c.b16 %v1452, %v1448
    %v1741 = vpack.c.b16 %v1453, %v1449
    %v1742 = vpack.c.b16 %v1454, %v1450
    %v1743 = vpack.c.b16 %v1455, %v1451
    %v1744 = vpack.c.b16 %v1460, %v1456
    %v1745 = vpack.c.b16 %v1461, %v1457
    %v1746 = vpack.c.b16 %v1462, %v1458
    %v1747 = vpack.c.b16 %v1463, %v1459
    %v1748 = vpack.c.b16 %v1468, %v1464
    %v1749 = vpack.c.b16 %v1469, %v1465
    %v1750 = vpack.c.b16 %v1470, %v1466
    %v1751 = vpack.c.b16 %v1471, %v1467
    %v1752 = vpack.c.b16 %v1476, %v1472
    %v1753 = vpack.c.b16 %v1477, %v1473
    %v1754 = vpack.c.b16 %v1478, %v1474
    %v1755 = vpack.c.b16 %v1479, %v1475
    %v1756 = vpack.c.b16 %v1484, %v1480
    %v1757 = vpack.c.b16 %v1485, %v1481
    %v1758 = vpack.c.b16 %v1486, %v1482
    %v1759 = vpack.c.b16 %v1487, %v1483
    %v1760 = vpack.c.b16 %v1492, %v1488
    %v1761 = vpack.c.b16 %v1493, %v1489
    %v1762 = vpack.c.b16 %v1494, %v1490
    %v1763 = vpack.c.b16 %v1495, %v1491
    %v1764 = vpack.c.b16 %v1500, %v1496
    %v1765 = vpack.c.b16 %v1501, %v1497
    %v1766 = vpack.c.b16 %v1502, %v1498
    %v1767 = vpack.c.b16 %v1503, %v1499
    %v1768 = vpack.c.b16 %v1508, %v1504
    %v1769 = vpack.c.b16 %v1509, %v1505
    %v1770 = vpack.c.b16 %v1510, %v1506
    %v1771 = vpack.c.b16 %v1511, %v1507
    %v1772 = vpack.c.b16 %v1516, %v1512
    %v1773 = vpack.c.b16 %v1517, %v1513
    %v1774 = vpack.c.b16 %v1518, %v1514
    %v1775 = vpack.c.b16 %v1519, %v1515
    %2032 = vmatprep.subr.bf16.mxu0 %v1549
    %2033 = vmatpush1.bf16.msra.mxu0 %v1548
    %2034 = vmatprep.subr.bf16.mxu0 %v1545
    %2035 = vmatpush1.bf16.msra.mxu0 %v1544
    %2036 = vmatprep.subr.bf16.mxu0 %v1541
    %2037 = vmatpush1.bf16.msra.mxu0 %v1540
    %2038 = vmatprep.subr.bf16.mxu0 %v1537
    %2039 = vmatpush1.bf16.msra.mxu0 %v1536
    %2040 = vmatprep.subr.bf16.mxu0 %v1533
    %2041 = vmatpush1.bf16.msra.mxu0 %v1532
    %2042 = vmatprep.subr.bf16.mxu0 %v1529
    %2043 = vmatpush1.bf16.msra.mxu0 %v1528
    %2044 = vmatprep.subr.bf16.mxu0 %v1525
    %2045 = vmatpush1.bf16.msra.mxu0 %v1524
    %2046 = vmatprep.subr.bf16.mxu0 %v1521
    %2047 = vmatpush1.bf16.msra.mxu0 %v1520
    %2048 = vmatprep.subr.bf16.mxu0 %v1581
    %2049 = vmatpush2.bf16.msra.mxu0 %v1580
    %2050 = vmatprep.subr.bf16.mxu0 %v1577
    %2051 = vmatpush2.bf16.msra.mxu0 %v1576
    %2052 = vmatprep.subr.bf16.mxu0 %v1573
    %2053 = vmatpush2.bf16.msra.mxu0 %v1572
    %2054 = vmatprep.subr.bf16.mxu0 %v1569
    %2055 = vmatpush2.bf16.msra.mxu0 %v1568
    %2056 = vmatprep.subr.bf16.mxu0 %v1565
    %2057 = vmatpush2.bf16.msra.mxu0 %v1564
    %2058 = vmatprep.subr.bf16.mxu0 %v1561
    %2059 = vmatpush2.bf16.msra.mxu0 %v1560
    %2060 = vmatprep.subr.bf16.mxu0 %v1557
    %2061 = vmatpush2.bf16.msra.mxu0 %v1556
    %2062 = vmatprep.subr.bf16.mxu0 %v1553
    %2063 = vmatpush2.bf16.msra.mxu0 %v1552
    %2064 = vmatprep.mubr.bf16.mxu0 %v467
    %2065 = vmatmul.mubr.bf16.gmra.mxu0 %v466
    %v2066 = vpop.f32.mrf.mxu0
    %v2067 = vadd.f32 %v735, %v2066
    %v2068 = vpop.f32.mrf.mxu0
    %v2069 = vadd.f32 %v739, %v2068
    %v2070 = vpop.f32.mrf.mxu0
    %v2071 = vadd.f32 %v735, %v2070
    %v2072 = vpop.f32.mrf.mxu0
    %v2073 = vadd.f32 %v739, %v2072
    %2074 = vdwg.mxu0
    %2075 = vmatprep.subr.bf16.mxu0 %v1613
    %2076 = vmatpush1.bf16.msra.mxu0 %v1612
    %2077 = vmatprep.subr.bf16.mxu0 %v1609
    %2078 = vmatpush1.bf16.msra.mxu0 %v1608
    %2079 = vmatprep.subr.bf16.mxu0 %v1605
    %2080 = vmatpush1.bf16.msra.mxu0 %v1604
    %2081 = vmatprep.subr.bf16.mxu0 %v1601
    %2082 = vmatpush1.bf16.msra.mxu0 %v1600
    %2083 = vmatprep.subr.bf16.mxu0 %v1597
    %2084 = vmatpush1.bf16.msra.mxu0 %v1596
    %2085 = vmatprep.subr.bf16.mxu0 %v1593
    %2086 = vmatpush1.bf16.msra.mxu0 %v1592
    %2087 = vmatprep.subr.bf16.mxu0 %v1589
    %2088 = vmatpush1.bf16.msra.mxu0 %v1588
    %2089 = vmatprep.subr.bf16.mxu0 %v1585
    %2090 = vmatpush1.bf16.msra.mxu0 %v1584
    %2091 = vmatprep.subr.bf16.mxu0 %v1645
    %2092 = vmatpush2.bf16.msra.mxu0 %v1644
    %2093 = vmatprep.subr.bf16.mxu0 %v1641
    %2094 = vmatpush2.bf16.msra.mxu0 %v1640
    %2095 = vmatprep.subr.bf16.mxu0 %v1637
    %2096 = vmatpush2.bf16.msra.mxu0 %v1636
    %2097 = vmatprep.subr.bf16.mxu0 %v1633
    %2098 = vmatpush2.bf16.msra.mxu0 %v1632
    %2099 = vmatprep.subr.bf16.mxu0 %v1629
    %2100 = vmatpush2.bf16.msra.mxu0 %v1628
    %2101 = vmatprep.subr.bf16.mxu0 %v1625
    %2102 = vmatpush2.bf16.msra.mxu0 %v1624
    %2103 = vmatprep.subr.bf16.mxu0 %v1621
    %2104 = vmatpush2.bf16.msra.mxu0 %v1620
    %2105 = vmatprep.subr.bf16.mxu0 %v1617
    %2106 = vmatpush2.bf16.msra.mxu0 %v1616
    %2107 = vmatprep.mubr.bf16.mxu0 %v469
    %2108 = vmatmul.mubr.bf16.gmra.mxu0 %v468
    %v2109 = vpop.f32.mrf.mxu0
    %v2110 = vadd.f32 %v2067, %v2109
    %v2111 = vpop.f32.mrf.mxu0
    %v2112 = vadd.f32 %v2069, %v2111
    %v2113 = vpop.f32.mrf.mxu0
    %v2114 = vadd.f32 %v2071, %v2113
    %v2115 = vpop.f32.mrf.mxu0
    %v2116 = vadd.f32 %v2073, %v2115
    %2117 = vdwg.mxu0
    %2118 = vmatprep.subr.bf16.mxu0 %v1677
    %2119 = vmatpush1.bf16.msra.mxu0 %v1676
    %2120 = vmatprep.subr.bf16.mxu0 %v1673
    %2121 = vmatpush1.bf16.msra.mxu0 %v1672
    %2122 = vmatprep.subr.bf16.mxu0 %v1669
    %2123 = vmatpush1.bf16.msra.mxu0 %v1668
    %2124 = vmatprep.subr.bf16.mxu0 %v1665
    %2125 = vmatpush1.bf16.msra.mxu0 %v1664
    %2126 = vmatprep.subr.bf16.mxu0 %v1661
    %2127 = vmatpush1.bf16.msra.mxu0 %v1660
    %2128 = vmatprep.subr.bf16.mxu0 %v1657
    %2129 = vmatpush1.bf16.msra.mxu0 %v1656
    %2130 = vmatprep.subr.bf16.mxu0 %v1653
    %2131 = vmatpush1.bf16.msra.mxu0 %v1652
    %2132 = vmatprep.subr.bf16.mxu0 %v1649
    %2133 = vmatpush1.bf16.msra.mxu0 %v1648
    %2134 = vmatprep.subr.bf16.mxu0 %v1709
    %2135 = vmatpush2.bf16.msra.mxu0 %v1708
    %2136 = vmatprep.subr.bf16.mxu0 %v1705
    %2137 = vmatpush2.bf16.msra.mxu0 %v1704
    %2138 = vmatprep.subr.bf16.mxu0 %v1701
    %2139 = vmatpush2.bf16.msra.mxu0 %v1700
    %2140 = vmatprep.subr.bf16.mxu0 %v1697
    %2141 = vmatpush2.bf16.msra.mxu0 %v1696
    %2142 = vmatprep.subr.bf16.mxu0 %v1693
    %2143 = vmatpush2.bf16.msra.mxu0 %v1692
    %2144 = vmatprep.subr.bf16.mxu0 %v1689
    %2145 = vmatpush2.bf16.msra.mxu0 %v1688
    %2146 = vmatprep.subr.bf16.mxu0 %v1685
    %2147 = vmatpush2.bf16.msra.mxu0 %v1684
    %2148 = vmatprep.subr.bf16.mxu0 %v1681
    %2149 = vmatpush2.bf16.msra.mxu0 %v1680
    %2150 = vmatprep.mubr.bf16.mxu0 %v471
    %2151 = vmatmul.mubr.bf16.gmra.mxu0 %v470
    %v2152 = vpop.f32.mrf.mxu0
    %v2153 = vadd.f32 %v2110, %v2152
    %v2154 = vpop.f32.mrf.mxu0
    %v2155 = vadd.f32 %v2112, %v2154
    %v2156 = vpop.f32.mrf.mxu0
    %v2157 = vadd.f32 %v2114, %v2156
    %v2158 = vpop.f32.mrf.mxu0
    %v2159 = vadd.f32 %v2116, %v2158
    %2160 = vdwg.mxu0
    %2161 = vmatprep.subr.bf16.mxu0 %v1741
    %2162 = vmatpush1.bf16.msra.mxu0 %v1740
    %2163 = vmatprep.subr.bf16.mxu0 %v1737
    %2164 = vmatpush1.bf16.msra.mxu0 %v1736
    %2165 = vmatprep.subr.bf16.mxu0 %v1733
    %2166 = vmatpush1.bf16.msra.mxu0 %v1732
    %2167 = vmatprep.subr.bf16.mxu0 %v1729
    %2168 = vmatpush1.bf16.msra.mxu0 %v1728
    %2169 = vmatprep.subr.bf16.mxu0 %v1725
    %2170 = vmatpush1.bf16.msra.mxu0 %v1724
    %2171 = vmatprep.subr.bf16.mxu0 %v1721
    %2172 = vmatpush1.bf16.msra.mxu0 %v1720
    %2173 = vmatprep.subr.bf16.mxu0 %v1717
    %2174 = vmatpush1.bf16.msra.mxu0 %v1716
    %2175 = vmatprep.subr.bf16.mxu0 %v1713
    %2176 = vmatpush1.bf16.msra.mxu0 %v1712
    %2177 = vmatprep.subr.bf16.mxu0 %v1773
    %2178 = vmatpush2.bf16.msra.mxu0 %v1772
    %2179 = vmatprep.subr.bf16.mxu0 %v1769
    %2180 = vmatpush2.bf16.msra.mxu0 %v1768
    %2181 = vmatprep.subr.bf16.mxu0 %v1765
    %2182 = vmatpush2.bf16.msra.mxu0 %v1764
    %2183 = vmatprep.subr.bf16.mxu0 %v1761
    %2184 = vmatpush2.bf16.msra.mxu0 %v1760
    %2185 = vmatprep.subr.bf16.mxu0 %v1757
    %2186 = vmatpush2.bf16.msra.mxu0 %v1756
    %2187 = vmatprep.subr.bf16.mxu0 %v1753
    %2188 = vmatpush2.bf16.msra.mxu0 %v1752
    %2189 = vmatprep.subr.bf16.mxu0 %v1749
    %2190 = vmatpush2.bf16.msra.mxu0 %v1748
    %2191 = vmatprep.subr.bf16.mxu0 %v1745
    %2192 = vmatpush2.bf16.msra.mxu0 %v1744
    %2193 = vmatprep.mubr.bf16.mxu0 %v473
    %2194 = vmatmul.mubr.bf16.gmra.mxu0 %v472
    %v2195 = vpop.f32.mrf.mxu0
    %v2196 = vadd.f32 %v2153, %v2195
    %v2197 = vpop.f32.mrf.mxu0
    %v2198 = vadd.f32 %v2155, %v2197
    %v2199 = vpop.f32.mrf.mxu0
    %v2200 = vadd.f32 %v2157, %v2199
    %v2201 = vpop.f32.mrf.mxu0
    %v2202 = vadd.f32 %v2159, %v2201
    %2203 = vdwg.mxu0
    %2204 = vmatprep.subr.bf16.mxu0 %v1551
    %2205 = vmatpush1.bf16.msra.mxu0 %v1550
    %2206 = vmatprep.subr.bf16.mxu0 %v1547
    %2207 = vmatpush1.bf16.msra.mxu0 %v1546
    %2208 = vmatprep.subr.bf16.mxu0 %v1543
    %2209 = vmatpush1.bf16.msra.mxu0 %v1542
    %2210 = vmatprep.subr.bf16.mxu0 %v1539
    %2211 = vmatpush1.bf16.msra.mxu0 %v1538
    %2212 = vmatprep.subr.bf16.mxu0 %v1535
    %2213 = vmatpush1.bf16.msra.mxu0 %v1534
    %2214 = vmatprep.subr.bf16.mxu0 %v1531
    %2215 = vmatpush1.bf16.msra.mxu0 %v1530
    %2216 = vmatprep.subr.bf16.mxu0 %v1527
    %2217 = vmatpush1.bf16.msra.mxu0 %v1526
    %2218 = vmatprep.subr.bf16.mxu0 %v1523
    %2219 = vmatpush1.bf16.msra.mxu0 %v1522
    %2220 = vmatprep.subr.bf16.mxu0 %v1583
    %2221 = vmatpush2.bf16.msra.mxu0 %v1582
    %2222 = vmatprep.subr.bf16.mxu0 %v1579
    %2223 = vmatpush2.bf16.msra.mxu0 %v1578
    %2224 = vmatprep.subr.bf16.mxu0 %v1575
    %2225 = vmatpush2.bf16.msra.mxu0 %v1574
    %2226 = vmatprep.subr.bf16.mxu0 %v1571
    %2227 = vmatpush2.bf16.msra.mxu0 %v1570
    %2228 = vmatprep.subr.bf16.mxu0 %v1567
    %2229 = vmatpush2.bf16.msra.mxu0 %v1566
    %2230 = vmatprep.subr.bf16.mxu0 %v1563
    %2231 = vmatpush2.bf16.msra.mxu0 %v1562
    %2232 = vmatprep.subr.bf16.mxu0 %v1559
    %2233 = vmatpush2.bf16.msra.mxu0 %v1558
    %2234 = vmatprep.subr.bf16.mxu0 %v1555
    %2235 = vmatpush2.bf16.msra.mxu0 %v1554
    %2236 = vmatprep.mubr.bf16.mxu0 %v467
    %2237 = vmatmul.mubr.bf16.gmra.mxu0 %v466
    %v2238 = vpop.f32.mrf.mxu0
    %v2239 = vadd.f32 %v743, %v2238
    %v2240 = vpop.f32.mrf.mxu0
    %v2241 = vadd.f32 %v747, %v2240
    %v2242 = vpop.f32.mrf.mxu0
    %v2243 = vadd.f32 %v743, %v2242
    %v2244 = vpop.f32.mrf.mxu0
    %v2245 = vadd.f32 %v747, %v2244
    %2246 = vdwg.mxu0
    %2247 = vmatprep.subr.bf16.mxu0 %v1615
    %2248 = vmatpush1.bf16.msra.mxu0 %v1614
    %2249 = vmatprep.subr.bf16.mxu0 %v1611
    %2250 = vmatpush1.bf16.msra.mxu0 %v1610
    %2251 = vmatprep.subr.bf16.mxu0 %v1607
    %2252 = vmatpush1.bf16.msra.mxu0 %v1606
    %2253 = vmatprep.subr.bf16.mxu0 %v1603
    %2254 = vmatpush1.bf16.msra.mxu0 %v1602
    %2255 = vmatprep.subr.bf16.mxu0 %v1599
    %2256 = vmatpush1.bf16.msra.mxu0 %v1598
    %2257 = vmatprep.subr.bf16.mxu0 %v1595
    %2258 = vmatpush1.bf16.msra.mxu0 %v1594
    %2259 = vmatprep.subr.bf16.mxu0 %v1591
    %2260 = vmatpush1.bf16.msra.mxu0 %v1590
    %2261 = vmatprep.subr.bf16.mxu0 %v1587
    %2262 = vmatpush1.bf16.msra.mxu0 %v1586
    %2263 = vmatprep.subr.bf16.mxu0 %v1647
    %2264 = vmatpush2.bf16.msra.mxu0 %v1646
    %2265 = vmatprep.subr.bf16.mxu0 %v1643
    %2266 = vmatpush2.bf16.msra.mxu0 %v1642
    %2267 = vmatprep.subr.bf16.mxu0 %v1639
    %2268 = vmatpush2.bf16.msra.mxu0 %v1638
    %2269 = vmatprep.subr.bf16.mxu0 %v1635
    %2270 = vmatpush2.bf16.msra.mxu0 %v1634
    %2271 = vmatprep.subr.bf16.mxu0 %v1631
    %2272 = vmatpush2.bf16.msra.mxu0 %v1630
    %2273 = vmatprep.subr.bf16.mxu0 %v1627
    %2274 = vmatpush2.bf16.msra.mxu0 %v1626
    %2275 = vmatprep.subr.bf16.mxu0 %v1623
    %2276 = vmatpush2.bf16.msra.mxu0 %v1622
    %2277 = vmatprep.subr.bf16.mxu0 %v1619
    %2278 = vmatpush2.bf16.msra.mxu0 %v1618
    %2279 = vmatprep.mubr.bf16.mxu0 %v469
    %2280 = vmatmul.mubr.bf16.gmra.mxu0 %v468
    %v2281 = vpop.f32.mrf.mxu0
    %v2282 = vadd.f32 %v2239, %v2281
    %v2283 = vpop.f32.mrf.mxu0
    %v2284 = vadd.f32 %v2241, %v2283
    %v2285 = vpop.f32.mrf.mxu0
    %v2286 = vadd.f32 %v2243, %v2285
    %v2287 = vpop.f32.mrf.mxu0
    %v2288 = vadd.f32 %v2245, %v2287
    %2289 = vdwg.mxu0
    %2290 = vmatprep.subr.bf16.mxu0 %v1679
    %2291 = vmatpush1.bf16.msra.mxu0 %v1678
    %2292 = vmatprep.subr.bf16.mxu0 %v1675
    %2293 = vmatpush1.bf16.msra.mxu0 %v1674
    %2294 = vmatprep.subr.bf16.mxu0 %v1671
    %2295 = vmatpush1.bf16.msra.mxu0 %v1670
    %2296 = vmatprep.subr.bf16.mxu0 %v1667
    %2297 = vmatpush1.bf16.msra.mxu0 %v1666
    %2298 = vmatprep.subr.bf16.mxu0 %v1663
    %2299 = vmatpush1.bf16.msra.mxu0 %v1662
    %2300 = vmatprep.subr.bf16.mxu0 %v1659
    %2301 = vmatpush1.bf16.msra.mxu0 %v1658
    %2302 = vmatprep.subr.bf16.mxu0 %v1655
    %2303 = vmatpush1.bf16.msra.mxu0 %v1654
    %2304 = vmatprep.subr.bf16.mxu0 %v1651
    %2305 = vmatpush1.bf16.msra.mxu0 %v1650
    %2306 = vmatprep.subr.bf16.mxu0 %v1711
    %2307 = vmatpush2.bf16.msra.mxu0 %v1710
    %2308 = vmatprep.subr.bf16.mxu0 %v1707
    %2309 = vmatpush2.bf16.msra.mxu0 %v1706
    %2310 = vmatprep.subr.bf16.mxu0 %v1703
    %2311 = vmatpush2.bf16.msra.mxu0 %v1702
    %2312 = vmatprep.subr.bf16.mxu0 %v1699
    %2313 = vmatpush2.bf16.msra.mxu0 %v1698
    %2314 = vmatprep.subr.bf16.mxu0 %v1695
    %2315 = vmatpush2.bf16.msra.mxu0 %v1694
    %2316 = vmatprep.subr.bf16.mxu0 %v1691
    %2317 = vmatpush2.bf16.msra.mxu0 %v1690
    %2318 = vmatprep.subr.bf16.mxu0 %v1687
    %2319 = vmatpush2.bf16.msra.mxu0 %v1686
    %2320 = vmatprep.subr.bf16.mxu0 %v1683
    %2321 = vmatpush2.bf16.msra.mxu0 %v1682
    %2322 = vmatprep.mubr.bf16.mxu0 %v471
    %2323 = vmatmul.mubr.bf16.gmra.mxu0 %v470
    %v2324 = vpop.f32.mrf.mxu0
    %v2325 = vadd.f32 %v2282, %v2324
    %v2326 = vpop.f32.mrf.mxu0
    %v2327 = vadd.f32 %v2284, %v2326
    %v2328 = vpop.f32.mrf.mxu0
    %v2329 = vadd.f32 %v2286, %v2328
    %v2330 = vpop.f32.mrf.mxu0
    %v2331 = vadd.f32 %v2288, %v2330
    %2332 = vdwg.mxu0
    %2333 = vmatprep.subr.bf16.mxu0 %v1743
    %2334 = vmatpush1.bf16.msra.mxu0 %v1742
    %2335 = vmatprep.subr.bf16.mxu0 %v1739
    %2336 = vmatpush1.bf16.msra.mxu0 %v1738
    %2337 = vmatprep.subr.bf16.mxu0 %v1735
    %2338 = vmatpush1.bf16.msra.mxu0 %v1734
    %2339 = vmatprep.subr.bf16.mxu0 %v1731
    %2340 = vmatpush1.bf16.msra.mxu0 %v1730
    %2341 = vmatprep.subr.bf16.mxu0 %v1727
    %2342 = vmatpush1.bf16.msra.mxu0 %v1726
    %2343 = vmatprep.subr.bf16.mxu0 %v1723
    %2344 = vmatpush1.bf16.msra.mxu0 %v1722
    %2345 = vmatprep.subr.bf16.mxu0 %v1719
    %2346 = vmatpush1.bf16.msra.mxu0 %v1718
    %2347 = vmatprep.subr.bf16.mxu0 %v1715
    %2348 = vmatpush1.bf16.msra.mxu0 %v1714
    %2349 = vmatprep.subr.bf16.mxu0 %v1775
    %2350 = vmatpush2.bf16.msra.mxu0 %v1774
    %2351 = vmatprep.subr.bf16.mxu0 %v1771
    %2352 = vmatpush2.bf16.msra.mxu0 %v1770
    %2353 = vmatprep.subr.bf16.mxu0 %v1767
    %2354 = vmatpush2.bf16.msra.mxu0 %v1766
    %2355 = vmatprep.subr.bf16.mxu0 %v1763
    %2356 = vmatpush2.bf16.msra.mxu0 %v1762
    %2357 = vmatprep.subr.bf16.mxu0 %v1759
    %2358 = vmatpush2.bf16.msra.mxu0 %v1758
    %2359 = vmatprep.subr.bf16.mxu0 %v1755
    %2360 = vmatpush2.bf16.msra.mxu0 %v1754
    %2361 = vmatprep.subr.bf16.mxu0 %v1751
    %2362 = vmatpush2.bf16.msra.mxu0 %v1750
    %2363 = vmatprep.subr.bf16.mxu0 %v1747
    %2364 = vmatpush2.bf16.msra.mxu0 %v1746
    %2365 = vmatprep.mubr.bf16.mxu0 %v473
    %2366 = vmatmul.mubr.bf16.gmra.mxu0 %v472
    %v2367 = vpop.f32.mrf.mxu0
    %v2368 = vadd.f32 %v2325, %v2367
    %v2369 = vpop.f32.mrf.mxu0
    %v2370 = vadd.f32 %v2327, %v2369
    %v2371 = vpop.f32.mrf.mxu0
    %v2372 = vadd.f32 %v2329, %v2371
    %v2373 = vpop.f32.mrf.mxu0
    %v2374 = vadd.f32 %v2331, %v2373
    %2375 = vdwg.mxu0
    %v2376 = vmax.f32 %v2196, 0.0
    %v2377 = vmax.f32 %v2198, 0.0
    %v2378 = vmax.f32 %v2368, 0.0
    %v2379 = vmax.f32 %v2370, 0.0
    %v2380 = vmax.f32 %v2200, 0.0
    %v2381 = vmax.f32 %v2202, 0.0
    %v2382 = vmax.f32 %v2372, 0.0
    %v2383 = vmax.f32 %v2374, 0.0
    %v2384 = vpack.c.bf16 %v2380, %v2376
    %v2385 = vpack.c.bf16 %v2381, %v2377
    %v2386 = vpack.c.bf16 %v2382, %v2378
    %v2387 = vpack.c.bf16 %v2383, %v2379
    %v2388 = vld [vmem:[#allocation9] sm:$0xf]
    %v2389 = vld [vmem:[#allocation9 + $0x4] sm:$0xf]
    %v2390 = vld [vmem:[#allocation9 + $0x8] sm:$0xf]
    %v2391 = vld [vmem:[#allocation9 + $0xc] sm:$0xf]
    %v2392 = vld [vmem:[#allocation9 + $0x10] sm:$0xf]
    %v2393 = vld [vmem:[#allocation9 + $0x14] sm:$0xf]
    %v2394 = vld [vmem:[#allocation9 + $0x18] sm:$0xf]
    %v2395 = vld [vmem:[#allocation9 + $0x1c] sm:$0xf]
    %v2396 = vld [vmem:[#allocation9 + $0x20] sm:$0xf]
    %v2397 = vld [vmem:[#allocation9 + $0x24] sm:$0xf]
    %v2398 = vld [vmem:[#allocation9 + $0x28] sm:$0xf]
    %v2399 = vld [vmem:[#allocation9 + $0x2c] sm:$0xf]
    %v2400 = vld [vmem:[#allocation9 + $0x30] sm:$0xf]
    %v2401 = vld [vmem:[#allocation9 + $0x34] sm:$0xf]
    %v2402 = vld [vmem:[#allocation9 + $0x38] sm:$0xf]
    %v2403 = vld [vmem:[#allocation9 + $0x3c] sm:$0xf]
    %v2404 = vld [vmem:[#allocation9 + $0x40] sm:$0xf]
    %v2405 = vld [vmem:[#allocation9 + $0x44] sm:$0xf]
    %v2406 = vld [vmem:[#allocation9 + $0x48] sm:$0xf]
    %v2407 = vld [vmem:[#allocation9 + $0x4c] sm:$0xf]
    %v2408 = vld [vmem:[#allocation9 + $0x50] sm:$0xf]
    %v2409 = vld [vmem:[#allocation9 + $0x54] sm:$0xf]
    %v2410 = vld [vmem:[#allocation9 + $0x58] sm:$0xf]
    %v2411 = vld [vmem:[#allocation9 + $0x5c] sm:$0xf]
    %v2412 = vld [vmem:[#allocation9 + $0x60] sm:$0xf]
    %v2413 = vld [vmem:[#allocation9 + $0x64] sm:$0xf]
    %v2414 = vld [vmem:[#allocation9 + $0x68] sm:$0xf]
    %v2415 = vld [vmem:[#allocation9 + $0x6c] sm:$0xf]
    %v2416 = vld [vmem:[#allocation9 + $0x70] sm:$0xf]
    %v2417 = vld [vmem:[#allocation9 + $0x74] sm:$0xf]
    %v2418 = vld [vmem:[#allocation9 + $0x78] sm:$0xf]
    %v2419 = vld [vmem:[#allocation9 + $0x7c] sm:$0xf]
    %v2420 = vld [vmem:[#allocation9 + $0x80] sm:$0xf]
    %v2421 = vld [vmem:[#allocation9 + $0x84] sm:$0xf]
    %v2422 = vld [vmem:[#allocation9 + $0x88] sm:$0xf]
    %v2423 = vld [vmem:[#allocation9 + $0x8c] sm:$0xf]
    %v2424 = vld [vmem:[#allocation9 + $0x90] sm:$0xf]
    %v2425 = vld [vmem:[#allocation9 + $0x94] sm:$0xf]
    %v2426 = vld [vmem:[#allocation9 + $0x98] sm:$0xf]
    %v2427 = vld [vmem:[#allocation9 + $0x9c] sm:$0xf]
    %v2428 = vld [vmem:[#allocation9 + $0xa0] sm:$0xf]
    %v2429 = vld [vmem:[#allocation9 + $0xa4] sm:$0xf]
    %v2430 = vld [vmem:[#allocation9 + $0xa8] sm:$0xf]
    %v2431 = vld [vmem:[#allocation9 + $0xac] sm:$0xf]
    %v2432 = vld [vmem:[#allocation9 + $0xb0] sm:$0xf]
    %v2433 = vld [vmem:[#allocation9 + $0xb4] sm:$0xf]
    %v2434 = vld [vmem:[#allocation9 + $0xb8] sm:$0xf]
    %v2435 = vld [vmem:[#allocation9 + $0xbc] sm:$0xf]
    %v2436 = vld [vmem:[#allocation9 + $0xc0] sm:$0xf]
    %v2437 = vld [vmem:[#allocation9 + $0xc4] sm:$0xf]
    %v2438 = vld [vmem:[#allocation9 + $0xc8] sm:$0xf]
    %v2439 = vld [vmem:[#allocation9 + $0xcc] sm:$0xf]
    %v2440 = vld [vmem:[#allocation9 + $0xd0] sm:$0xf]
    %v2441 = vld [vmem:[#allocation9 + $0xd4] sm:$0xf]
    %v2442 = vld [vmem:[#allocation9 + $0xd8] sm:$0xf]
    %v2443 = vld [vmem:[#allocation9 + $0xdc] sm:$0xf]
    %v2444 = vld [vmem:[#allocation9 + $0xe0] sm:$0xf]
    %v2445 = vld [vmem:[#allocation9 + $0xe4] sm:$0xf]
    %v2446 = vld [vmem:[#allocation9 + $0xe8] sm:$0xf]
    %v2447 = vld [vmem:[#allocation9 + $0xec] sm:$0xf]
    %v2448 = vld [vmem:[#allocation9 + $0xf0] sm:$0xf]
    %v2449 = vld [vmem:[#allocation9 + $0xf4] sm:$0xf]
    %v2450 = vld [vmem:[#allocation9 + $0xf8] sm:$0xf]
    %v2451 = vld [vmem:[#allocation9 + $0xfc] sm:$0xf]
    %v2452 = vld [vmem:[%s8] sm:$0x1]
    %v2454 = vlaneseq
    %v2455 = vshrl.u32 %v2454, 7
    %v2456 = vsub.s32 0, %v2455
    %v2457 = vrot.slane %v2452, %v2456
    %v2523 = vunpack.c.l.b16 %v2388
    %v2524 = vunpack.c.l.b16 %v2389
    %v2525 = vunpack.c.l.b16 %v2390
    %v2526 = vunpack.c.l.b16 %v2391
    %v2527 = vunpack.c.l.b16 %v2392
    %v2528 = vunpack.c.l.b16 %v2393
    %v2529 = vunpack.c.l.b16 %v2394
    %v2530 = vunpack.c.l.b16 %v2395
    %v2531 = vunpack.c.l.b16 %v2396
    %v2532 = vunpack.c.l.b16 %v2397
    %v2533 = vunpack.c.l.b16 %v2398
    %v2534 = vunpack.c.l.b16 %v2399
    %v2535 = vunpack.c.l.b16 %v2400
    %v2536 = vunpack.c.l.b16 %v2401
    %v2537 = vunpack.c.l.b16 %v2402
    %v2538 = vunpack.c.l.b16 %v2403
    %v2539 = vunpack.c.l.b16 %v2404
    %v2540 = vunpack.c.l.b16 %v2405
    %v2541 = vunpack.c.l.b16 %v2406
    %v2542 = vunpack.c.l.b16 %v2407
    %v2543 = vunpack.c.l.b16 %v2408
    %v2544 = vunpack.c.l.b16 %v2409
    %v2545 = vunpack.c.l.b16 %v2410
    %v2546 = vunpack.c.l.b16 %v2411
    %v2547 = vunpack.c.l.b16 %v2412
    %v2548 = vunpack.c.l.b16 %v2413
    %v2549 = vunpack.c.l.b16 %v2414
    %v2550 = vunpack.c.l.b16 %v2415
    %v2551 = vunpack.c.l.b16 %v2416
    %v2552 = vunpack.c.l.b16 %v2417
    %v2553 = vunpack.c.l.b16 %v2418
    %v2554 = vunpack.c.l.b16 %v2419
    %v2555 = vunpack.c.l.b16 %v2420
    %v2556 = vunpack.c.l.b16 %v2421
    %v2557 = vunpack.c.l.b16 %v2422
    %v2558 = vunpack.c.l.b16 %v2423
    %v2559 = vunpack.c.l.b16 %v2424
    %v2560 = vunpack.c.l.b16 %v2425
    %v2561 = vunpack.c.l.b16 %v2426
    %v2562 = vunpack.c.l.b16 %v2427
    %v2563 = vunpack.c.l.b16 %v2428
    %v2564 = vunpack.c.l.b16 %v2429
    %v2565 = vunpack.c.l.b16 %v2430
    %v2566 = vunpack.c.l.b16 %v2431
    %v2567 = vunpack.c.l.b16 %v2432
    %v2568 = vunpack.c.l.b16 %v2433
    %v2569 = vunpack.c.l.b16 %v2434
    %v2570 = vunpack.c.l.b16 %v2435
    %v2571 = vunpack.c.l.b16 %v2436
    %v2572 = vunpack.c.l.b16 %v2437
    %v2573 = vunpack.c.l.b16 %v2438
    %v2574 = vunpack.c.l.b16 %v2439
    %v2575 = vunpack.c.l.b16 %v2440
    %v2576 = vunpack.c.l.b16 %v2441
    %v2577 = vunpack.c.l.b16 %v2442
    %v2578 = vunpack.c.l.b16 %v2443
    %v2579 = vunpack.c.l.b16 %v2444
    %v2580 = vunpack.c.l.b16 %v2445
    %v2581 = vunpack.c.l.b16 %v2446
    %v2582 = vunpack.c.l.b16 %v2447
    %v2583 = vunpack.c.l.b16 %v2448
    %v2584 = vunpack.c.l.b16 %v2449
    %v2585 = vunpack.c.l.b16 %v2450
    %v2586 = vunpack.c.l.b16 %v2451
    %v2587 = vpack.c.b16 %v2524, %v2523
    %v2588 = vpack.c.b16 %v2526, %v2525
    %v2589 = vpack.c.b16 %v2528, %v2527
    %v2590 = vpack.c.b16 %v2530, %v2529
    %v2591 = vpack.c.b16 %v2532, %v2531
    %v2592 = vpack.c.b16 %v2534, %v2533
    %v2593 = vpack.c.b16 %v2536, %v2535
    %v2594 = vpack.c.b16 %v2538, %v2537
    %v2595 = vpack.c.b16 %v2540, %v2539
    %v2596 = vpack.c.b16 %v2542, %v2541
    %v2597 = vpack.c.b16 %v2544, %v2543
    %v2598 = vpack.c.b16 %v2546, %v2545
    %v2599 = vpack.c.b16 %v2548, %v2547
    %v2600 = vpack.c.b16 %v2550, %v2549
    %v2601 = vpack.c.b16 %v2552, %v2551
    %v2602 = vpack.c.b16 %v2554, %v2553
    %v2603 = vpack.c.b16 %v2556, %v2555
    %v2604 = vpack.c.b16 %v2558, %v2557
    %v2605 = vpack.c.b16 %v2560, %v2559
    %v2606 = vpack.c.b16 %v2562, %v2561
    %v2607 = vpack.c.b16 %v2564, %v2563
    %v2608 = vpack.c.b16 %v2566, %v2565
    %v2609 = vpack.c.b16 %v2568, %v2567
    %v2610 = vpack.c.b16 %v2570, %v2569
    %v2611 = vpack.c.b16 %v2572, %v2571
    %v2612 = vpack.c.b16 %v2574, %v2573
    %v2613 = vpack.c.b16 %v2576, %v2575
    %v2614 = vpack.c.b16 %v2578, %v2577
    %v2615 = vpack.c.b16 %v2580, %v2579
    %v2616 = vpack.c.b16 %v2582, %v2581
    %v2617 = vpack.c.b16 %v2584, %v2583
    %v2618 = vpack.c.b16 %v2586, %v2585
    %2651 = vmatprep.subr.bf16.mxu0 0
    %2652 = vmatpush1.bf16.msra.mxu0 %v2594
    %2653 = vmatprep.subr.bf16.mxu0 0
    %2654 = vmatpush1.bf16.msra.mxu0 %v2593
    %2655 = vmatprep.subr.bf16.mxu0 0
    %2656 = vmatpush1.bf16.msra.mxu0 %v2592
    %2657 = vmatprep.subr.bf16.mxu0 0
    %2658 = vmatpush1.bf16.msra.mxu0 %v2591
    %2659 = vmatprep.subr.bf16.mxu0 0
    %2660 = vmatpush1.bf16.msra.mxu0 %v2590
    %2661 = vmatprep.subr.bf16.mxu0 0
    %2662 = vmatpush1.bf16.msra.mxu0 %v2589
    %2663 = vmatprep.subr.bf16.mxu0 0
    %2664 = vmatpush1.bf16.msra.mxu0 %v2588
    %2665 = vmatprep.subr.bf16.mxu0 0
    %2666 = vmatpush1.bf16.msra.mxu0 %v2587
    %2667 = vmatprep.subr.bf16.mxu0 0
    %2668 = vmatpush2.bf16.msra.mxu0 %v2602
    %2669 = vmatprep.subr.bf16.mxu0 0
    %2670 = vmatpush2.bf16.msra.mxu0 %v2601
    %2671 = vmatprep.subr.bf16.mxu0 0
    %2672 = vmatpush2.bf16.msra.mxu0 %v2600
    %2673 = vmatprep.subr.bf16.mxu0 0
    %2674 = vmatpush2.bf16.msra.mxu0 %v2599
    %2675 = vmatprep.subr.bf16.mxu0 0
    %2676 = vmatpush2.bf16.msra.mxu0 %v2598
    %2677 = vmatprep.subr.bf16.mxu0 0
    %2678 = vmatpush2.bf16.msra.mxu0 %v2597
    %2679 = vmatprep.subr.bf16.mxu0 0
    %2680 = vmatpush2.bf16.msra.mxu0 %v2596
    %2681 = vmatprep.subr.bf16.mxu0 0
    %2682 = vmatpush2.bf16.msra.mxu0 %v2595
    %2683 = vmatprep.mubr.bf16.mxu0 %v2385
    %2684 = vmatmul.mubr.bf16.gmra.mxu0 %v2384
    %v2685 = vpop.f32.mrf.mxu0
    %v2686 = vadd.f32 %v2457, %v2685
    %v2687 = vpop.f32.mrf.mxu0
    %v2688 = vpop.f32.mrf.mxu0
    %v2689 = vadd.f32 %v2457, %v2688
    %v2690 = vpop.f32.mrf.mxu0
    %2691 = vdwg.mxu0
    %2692 = vmatprep.subr.bf16.mxu0 0
    %2693 = vmatpush1.bf16.msra.mxu0 %v2610
    %2694 = vmatprep.subr.bf16.mxu0 0
    %2695 = vmatpush1.bf16.msra.mxu0 %v2609
    %2696 = vmatprep.subr.bf16.mxu0 0
    %2697 = vmatpush1.bf16.msra.mxu0 %v2608
    %2698 = vmatprep.subr.bf16.mxu0 0
    %2699 = vmatpush1.bf16.msra.mxu0 %v2607
    %2700 = vmatprep.subr.bf16.mxu0 0
    %2701 = vmatpush1.bf16.msra.mxu0 %v2606
    %2702 = vmatprep.subr.bf16.mxu0 0
    %2703 = vmatpush1.bf16.msra.mxu0 %v2605
    %2704 = vmatprep.subr.bf16.mxu0 0
    %2705 = vmatpush1.bf16.msra.mxu0 %v2604
    %2706 = vmatprep.subr.bf16.mxu0 0
    %2707 = vmatpush1.bf16.msra.mxu0 %v2603
    %2708 = vmatprep.subr.bf16.mxu0 0
    %2709 = vmatpush2.bf16.msra.mxu0 %v2618
    %2710 = vmatprep.subr.bf16.mxu0 0
    %2711 = vmatpush2.bf16.msra.mxu0 %v2617
    %2712 = vmatprep.subr.bf16.mxu0 0
    %2713 = vmatpush2.bf16.msra.mxu0 %v2616
    %2714 = vmatprep.subr.bf16.mxu0 0
    %2715 = vmatpush2.bf16.msra.mxu0 %v2615
    %2716 = vmatprep.subr.bf16.mxu0 0
    %2717 = vmatpush2.bf16.msra.mxu0 %v2614
    %2718 = vmatprep.subr.bf16.mxu0 0
    %2719 = vmatpush2.bf16.msra.mxu0 %v2613
    %2720 = vmatprep.subr.bf16.mxu0 0
    %2721 = vmatpush2.bf16.msra.mxu0 %v2612
    %2722 = vmatprep.subr.bf16.mxu0 0
    %2723 = vmatpush2.bf16.msra.mxu0 %v2611
    %2724 = vmatprep.mubr.bf16.mxu0 %v2387
    %2725 = vmatmul.mubr.bf16.gmra.mxu0 %v2386
    %v2726 = vpop.f32.mrf.mxu0
    %v2727 = vadd.f32 %v2686, %v2726
    %v2728 = vpop.f32.mrf.mxu0
    %v2729 = vpop.f32.mrf.mxu0
    %v2730 = vadd.f32 %v2689, %v2729
    %v2731 = vpop.f32.mrf.mxu0
    %2732 = vdwg.mxu0
    %v2733 = vmax.f32 %v2727, 0.0
    %v2734 = vmax.f32 %v2730, 0.0
    %v2735 = vpack.c.bf16 %v2734, %v2733
    %v2736 = vld [vmem:[%s9] sm:$0xf]
    %v2737 = vld [vmem:[%s9 + $0x4] sm:$0xf]
    %v2738 = vld [vmem:[%s9 + $0x8] sm:$0xf]
    %v2739 = vld [vmem:[%s9 + $0xc] sm:$0xf]
    %v2740 = vld [vmem:[%s9 + $0x10] sm:$0xf]
    %v2741 = vld [vmem:[%s9 + $0x14] sm:$0xf]
    %v2742 = vld [vmem:[%s9 + $0x18] sm:$0xf]
    %v2743 = vld [vmem:[%s9 + $0x1c] sm:$0xf]
    %v2744 = vld [vmem:[%s9 + $0x20] sm:$0xf]
    %v2745 = vld [vmem:[%s9 + $0x24] sm:$0xf]
    %v2746 = vld [vmem:[%s9 + $0x28] sm:$0xf]
    %v2747 = vld [vmem:[%s9 + $0x2c] sm:$0xf]
    %v2748 = vld [vmem:[%s9 + $0x30] sm:$0xf]
    %v2749 = vld [vmem:[%s9 + $0x34] sm:$0xf]
    %v2750 = vld [vmem:[%s9 + $0x38] sm:$0xf]
    %v2751 = vld [vmem:[%s9 + $0x3c] sm:$0xf]
    %v2752 = vld [vmem:[#allocation10] sm:$0x1]
    %v2754 = vlaneseq
    %v2755 = vshrl.u32 %v2754, 7
    %v2756 = vsub.s32 0, %v2755
    %v2757 = vrot.slane %v2752, %v2756
    %v2775 = vunpack.c.l.b16 %v2736
    %v2776 = vunpack.c.l.b16 %v2737
    %v2777 = vunpack.c.l.b16 %v2738
    %v2778 = vunpack.c.l.b16 %v2739
    %v2779 = vunpack.c.l.b16 %v2740
    %v2780 = vunpack.c.l.b16 %v2741
    %v2781 = vunpack.c.l.b16 %v2742
    %v2782 = vunpack.c.l.b16 %v2743
    %v2783 = vunpack.c.l.b16 %v2744
    %v2784 = vunpack.c.l.b16 %v2745
    %v2785 = vunpack.c.l.b16 %v2746
    %v2786 = vunpack.c.l.b16 %v2747
    %v2787 = vunpack.c.l.b16 %v2748
    %v2788 = vunpack.c.l.b16 %v2749
    %v2789 = vunpack.c.l.b16 %v2750
    %v2790 = vunpack.c.l.b16 %v2751
    %v2791 = vpack.c.b16 %v2776, %v2775
    %v2792 = vpack.c.b16 %v2778, %v2777
    %v2793 = vpack.c.b16 %v2780, %v2779
    %v2794 = vpack.c.b16 %v2782, %v2781
    %v2795 = vpack.c.b16 %v2784, %v2783
    %v2796 = vpack.c.b16 %v2786, %v2785
    %v2797 = vpack.c.b16 %v2788, %v2787
    %v2798 = vpack.c.b16 %v2790, %v2789
    %2807 = vmatprep.subr.bf16.mxu0 0
    %2808 = vmatpush1.bf16.msra.mxu0 %v2798
    %2809 = vmatprep.subr.bf16.mxu0 0
    %2810 = vmatpush1.bf16.msra.mxu0 %v2797
    %2811 = vmatprep.subr.bf16.mxu0 0
    %2812 = vmatpush1.bf16.msra.mxu0 %v2796
    %2813 = vmatprep.subr.bf16.mxu0 0
    %2814 = vmatpush1.bf16.msra.mxu0 %v2795
    %2815 = vmatprep.subr.bf16.mxu0 0
    %2816 = vmatpush1.bf16.msra.mxu0 %v2794
    %2817 = vmatprep.subr.bf16.mxu0 0
    %2818 = vmatpush1.bf16.msra.mxu0 %v2793
    %2819 = vmatprep.subr.bf16.mxu0 0
    %2820 = vmatpush1.bf16.msra.mxu0 %v2792
    %2821 = vmatprep.subr.bf16.mxu0 0
    %2822 = vmatpush1.bf16.msra.mxu0 %v2791
    %2823 = vmatprep.subr.bf16.mxu0 0
    %2824 = vmatpush2.bf16.msra.mxu0 0
    %2825 = vmatprep.subr.bf16.mxu0 0
    %2826 = vmatpush2.bf16.msra.mxu0 0
    %2827 = vmatprep.subr.bf16.mxu0 0
    %2828 = vmatpush2.bf16.msra.mxu0 0
    %2829 = vmatprep.subr.bf16.mxu0 0
    %2830 = vmatpush2.bf16.msra.mxu0 0
    %2831 = vmatprep.subr.bf16.mxu0 0
    %2832 = vmatpush2.bf16.msra.mxu0 0
    %2833 = vmatprep.subr.bf16.mxu0 0
    %2834 = vmatpush2.bf16.msra.mxu0 0
    %2835 = vmatprep.subr.bf16.mxu0 0
    %2836 = vmatpush2.bf16.msra.mxu0 0
    %2837 = vmatprep.subr.bf16.mxu0 0
    %2838 = vmatpush2.bf16.msra.mxu0 0
    %2839 = vmatprep.mubr.bf16.mxu0 0
    %2840 = vmatmul.mubr.bf16.gmra.mxu0 %v2735
    %v2841 = vpop.f32.mrf.mxu0
    %v2842 = vadd.f32 %v2757, %v2841
    %v2843 = vpop.f32.mrf.mxu0
    %v2844 = vpop.f32.mrf.mxu0
    %v2845 = vadd.f32 %v2757, %v2844
    %v2846 = vpop.f32.mrf.mxu0
    %2847 = vdwg.mxu0
    %2848 = vst [vmem:[%s11] sm:$0xff] %v2842
    %2849 = vst [vmem:[%s11 + $0x8] sm:$0xff] %v2845
    // Predicated region
    $region70: #{net_forward.1} parent=1 // pred_check
      _
    $region71: #{net_forward.1} parent=1 // pred_check_branch
      %2851 = sbr.rel (0) target = $region73
    $region72: #{net_forward.1} parent=1 // pred_region
      _
    $region73: #{net_forward.1} parent=1 // pred_fallthru
      _
    // Predicated region
    $region74: #{net_forward.1} parent=1 // pred_check
      _
    $region75: #{net_forward.1} parent=1 // pred_check_branch
      %2853 = sbr.rel (0) target = $region77
    $region76: #{net_forward.1} parent=1 // pred_region
      _
    $region77: #{net_forward.1} parent=1 // pred_fallthru
      _
    %2854 = vsyncpa [#allocation3], 1
    %2855 = vsyncpa [#allocation5], 1
    %2856 = vsyncpa [#allocation8], 1
    %2857 = vsyncpa [#allocation11], 1

</llo_original>
